<compile_context>
chip_gen: v6e
topology: v6e:2x2x1
jax: 0.10.0
libtpu: 0.0.40
codegen_flags: <defaults>
</compile_context>

<pallas_src>
import functools

import jax
import jax.numpy as jnp
from jax import lax
from jax.experimental import pallas as pl
from jax.experimental.pallas import tpu as pltpu


def _mha_kernel(x_ref, wqkv_ref, bqkv_ref, wo_ref, bo_ref, out_ref, *,
                num_heads, head_dim, mxu_dtype):
    """One batch element: fused QKV projection, per-head attention, out-proj."""
    seq_len = x_ref.shape[1]
    d_model = x_ref.shape[2]

    # Cast x once; fused full-width QKV projection (N = 3*d_model feeds the
    # MXU far better than head_dim-wide matmuls).
    x = x_ref[0].astype(mxu_dtype)                                # (seq, d_model)
    wqkv = wqkv_ref[...].astype(mxu_dtype)                        # (d_model, 3*d_model)
    qkv_f32 = jnp.dot(x, wqkv, preferred_element_type=jnp.float32)
    qkv = (qkv_f32 + bqkv_ref[...]).astype(mxu_dtype)             # (seq, 3*d_model)

    wo = wo_ref[...].astype(mxu_dtype)                            # (d_model, d_model)

    acc = jnp.zeros((seq_len, d_model), jnp.float32)

    # Statically unrolled per-head loop: only static lane offsets, and only
    # one head's (seq, seq) score matrix is live at a time.
    for h in range(num_heads):
        off = h * head_dim
        q = qkv[:, off:off + head_dim]                            # scale folded into Wq/bq
        k = qkv[:, d_model + off:d_model + off + head_dim]
        v = qkv[:, 2 * d_model + off:2 * d_model + off + head_dim]

        # q @ k.T with the transpose folded into the MXU operand feed
        # (contract the last dim of both operands; no materialized k.T).
        scores = lax.dot_general(
            q, k, dimension_numbers=(((1,), (1,)), ((), ())),
            preferred_element_type=jnp.float32)                   # (seq, seq) f32

        # Numerically stable softmax; statistics in f32; normalization is
        # deferred past the P@V matmul (O(seq*head_dim) divide per head).
        m = jnp.max(scores, axis=-1, keepdims=True)
        e = jnp.exp(scores - m)
        denom = jnp.sum(e, axis=-1, keepdims=True)

        attn = jnp.dot(e.astype(mxu_dtype), v,
                       preferred_element_type=jnp.float32)        # (seq, head_dim)
        attn = attn * pl.reciprocal(denom, approx=False)

        # Fold this head's slice of the output projection into the f32
        # accumulator: concat(heads) @ Wo == sum_h attn_h @ Wo[h*hd:(h+1)*hd].
        acc = acc + jnp.dot(attn.astype(mxu_dtype),
                            wo[off:off + head_dim, :],
                            preferred_element_type=jnp.float32)

    out_ref[0] = (acc + bo_ref[...]).astype(out_ref.dtype)


def multi_head_attention(x, params, num_heads, *, mxu_dtype=jnp.bfloat16):
    """x: (batch, seq, d_model). params: dict of weights/biases (see __main__).

    mxu_dtype: dtype of MXU matmul operands (default bf16; accumulation and
    softmax statistics always run in f32).  Use jnp.float32 for exact parity.
    """
    batch, seq_len, d_model = x.shape
    assert d_model % num_heads == 0
    head_dim = d_model // num_heads
    scale = 1.0 / (head_dim ** 0.5)

    # Fuse Q/K/V weights/biases into single slabs; fold the attention scale
    # into Wq and bq so the kernel never scales the (seq, seq) scores.
    wqkv = jnp.concatenate(
        [params["wq"] * scale, params["wk"], params["wv"]], axis=1)   # (d_model, 3*d_model)
    bqkv = jnp.concatenate(
        [params["bq"] * scale, params["bk"], params["bv"]], axis=1)   # (1, 3*d_model)
    wo = params["wo"]                                                  # (d_model, d_model)
    bo = params["bo"]                                                  # (1, d_model)

    kernel = functools.partial(
        _mha_kernel, num_heads=num_heads, head_dim=head_dim, mxu_dtype=mxu_dtype)

    x_spec = pl.BlockSpec((1, seq_len, d_model), lambda b: (b, 0, 0))
    # Constant index_maps: weights/biases are DMA'd once and held in VMEM.
    wqkv_spec = pl.BlockSpec((d_model, 3 * d_model), lambda b: (0, 0))
    bqkv_spec = pl.BlockSpec((1, 3 * d_model), lambda b: (0, 0))
    wo_spec = pl.BlockSpec((d_model, d_model), lambda b: (0, 0))
    bo_spec = pl.BlockSpec((1, d_model), lambda b: (0, 0))
    out_spec = pl.BlockSpec((1, seq_len, d_model), lambda b: (b, 0, 0))

    # Working-set estimate -> scoped VMEM limit with headroom, clamped so it
    # stays within v7x's 64 MiB physical VMEM and v5e/v6e's 128 MiB.
    f32 = 4
    io_itemsize = jnp.dtype(x.dtype).itemsize
    w_itemsize = jnp.dtype(wqkv.dtype).itemsize
    mxu_itemsize = jnp.dtype(mxu_dtype).itemsize
    working_set = (
        2 * 2 * seq_len * d_model * io_itemsize              # x in + out, double-buffered
        + 2 * 4 * d_model * d_model * w_itemsize              # wqkv + wo, double-buffered
        + seq_len * 3 * d_model * (f32 + mxu_itemsize)        # QKV projection + cast copy
        + 4 * d_model * d_model * mxu_itemsize                # MXU-dtype weight copies
        + 2 * seq_len * seq_len * f32                         # scores + e (one head live)
        + 2 * seq_len * d_model * f32)                        # accumulator + misc
    vmem_limit = int(min(96 * 1024 * 1024,
                         max(32 * 1024 * 1024, 2 * working_set)))

    # Advisory cost estimate so XLA schedules surrounding HBM work sensibly.
    flops = (8 * batch * seq_len * d_model * d_model
             + 4 * batch * num_heads * seq_len * seq_len * head_dim)
    transcendentals = batch * num_heads * seq_len * seq_len
    bytes_accessed = (io_itemsize * 2 * batch * seq_len * d_model          # x in + out
                      + w_itemsize * (4 * d_model * d_model + 4 * d_model))  # weights+biases once

    return pl.pallas_call(
        kernel,
        out_shape=jax.ShapeDtypeStruct((batch, seq_len, d_model), x.dtype),
        grid_spec=pltpu.PrefetchScalarGridSpec(
            num_scalar_prefetch=0,
            grid=(batch,),
            in_specs=[x_spec, wqkv_spec, bqkv_spec, wo_spec, bo_spec],
            out_specs=out_spec,
        ),
        compiler_params=pltpu.CompilerParams(
            dimension_semantics=("parallel",),
            vmem_limit_bytes=vmem_limit),
        cost_estimate=pl.CostEstimate(
            flops=flops,
            transcendentals=transcendentals,
            bytes_accessed=bytes_accessed),
    )(x, wqkv, bqkv, wo, bo)


def _reference(x, params, num_heads):
    """Pure-JAX reference matching the PyTorch forward exactly."""
    batch, seq_len, d_model = x.shape
    head_dim = d_model // num_heads

    def lin(t, w, b):
        return jnp.einsum("bsd,de->bse", t, w) + b

    q = lin(x, params["wq"], params["bq"])
    k = lin(x, params["wk"], params["bk"])
    v = lin(x, params["wv"], params["bv"])

    def split(t):
        return t.reshape(batch, seq_len, num_heads, head_dim).transpose(0, 2, 1, 3)

    q, k, v = split(q), split(k), split(v)
    scores = jnp.einsum("bhqd,bhkd->bhqk", q, k) / (head_dim ** 0.5)
    weights = jax.nn.softmax(scores, axis=-1)
    attn = jnp.einsum("bhqk,bhkd->bhqd", weights, v)
    concat = attn.transpose(0, 2, 1, 3).reshape(batch, seq_len, d_model)
    return lin(concat, params["wo"], params["bo"])


if __name__ == "__main__":
    batch, seq_len, d_model, num_heads = 2, 8, 32, 4

    key = jax.random.PRNGKey(0)
    keys = jax.random.split(key, 9)

    # Deterministic parameter init. Weights stored as (in, out), i.e. the
    # transpose of PyTorch's nn.Linear weight layout.
    w_scale = 1.0 / (d_model ** 0.5)
    params = {
        "wq": jax.random.normal(keys[0], (d_model, d_model), jnp.float32) * w_scale,
        "bq": jax.random.normal(keys[1], (1, d_model), jnp.float32) * 0.1,
        "wk": jax.random.normal(keys[2], (d_model, d_model), jnp.float32) * w_scale,
        "bk": jax.random.normal(keys[3], (1, d_model), jnp.float32) * 0.1,
        "wv": jax.random.normal(keys[4], (d_model, d_model), jnp.float32) * w_scale,
        "bv": jax.random.normal(keys[5], (1, d_model), jnp.float32) * 0.1,
        "wo": jax.random.normal(keys[6], (d_model, d_model), jnp.float32) * w_scale,
        "bo": jax.random.normal(keys[7], (1, d_model), jnp.float32) * 0.1,
    }

    x = jax.random.normal(keys[8], (batch, seq_len, d_model), jnp.float32)

    ref = _reference(x, params, num_heads)

    # Exact path (f32 MXU operands): must match the f32 reference tightly.
    out_exact = multi_head_attention(x, params, num_heads, mxu_dtype=jnp.float32)
    out_exact = jax.block_until_ready(out_exact)
    assert out_exact.shape == (batch, seq_len, d_model)
    assert jnp.allclose(out_exact, ref, atol=1e-4, rtol=1e-4), "mismatch vs reference"

    # Default fast path: bf16 MXU operands, f32 accumulation + f32 softmax.
    out = multi_head_attention(x, params, num_heads)
    out = jax.block_until_ready(out)
    assert out.shape == (batch, seq_len, d_model)
    assert jnp.allclose(out, ref, atol=2e-1, rtol=1e-1), "bf16 path mismatch"

    print("KERNEL_OK")
</pallas_src>

<mosaic_0001>
module attributes {stable_mosaic.version = 11 : i64} {
  func.func @_mha_kernel(%arg0: i32, %arg1: memref<1x8x32xf32, #tpu.memory_space<vmem>>, %arg2: memref<32x96xf32, #tpu.memory_space<vmem>>, %arg3: memref<1x96xf32, #tpu.memory_space<vmem>>, %arg4: memref<32x32xf32, #tpu.memory_space<vmem>>, %arg5: memref<1x32xf32, #tpu.memory_space<vmem>>, %arg6: memref<1x8x32xf32, #tpu.memory_space<vmem>>) attributes {dimension_semantics = [#tpu.dimension_semantics<parallel>], iteration_bounds = array<i64: 2>, scalar_prefetch = 0 : i64, scratch_operands = 0 : i64, tpu.core_type = #tpu.core_type<tc>, window_params = [{transform_indices = @transform_0, window_bounds = array<i64: 1, 8, 32>}, {pipeline_mode = #tpu.pipeline_mode<synchronous>, transform_indices = @transform_1, window_bounds = array<i64: 32, 96>}, {pipeline_mode = #tpu.pipeline_mode<synchronous>, transform_indices = @transform_2, window_bounds = array<i64: 1, 96>}, {pipeline_mode = #tpu.pipeline_mode<synchronous>, transform_indices = @transform_3, window_bounds = array<i64: 32, 32>}, {pipeline_mode = #tpu.pipeline_mode<synchronous>, transform_indices = @transform_4, window_bounds = array<i64: 1, 32>}, {transform_indices = @transform_5, window_bounds = array<i64: 1, 8, 32>}]} {
    %c0 = arith.constant 0 : index
    %c0_0 = arith.constant 0 : index
    %c0_1 = arith.constant 0 : index
    %0 = vector.load %arg1[%c0, %c0_0, %c0_1] : memref<1x8x32xf32, #tpu.memory_space<vmem>>, vector<1x8x32xf32>
    %1 = vector.shape_cast %0 : vector<1x8x32xf32> to vector<8x32xf32>
    %c0_2 = arith.constant 0 : index
    %c0_3 = arith.constant 0 : index
    %2 = vector.load %arg2[%c0_2, %c0_3] : memref<32x96xf32, #tpu.memory_space<vmem>>, vector<32x96xf32>
    %cst = arith.constant dense<0.000000e+00> : vector<8x96xf32>
    %3 = tpu.matmul %1, %2, %cst {dimension_numbers = #tpu.dot_dimension_numbers<[1], [0], [0], [1], [0, 0, 1, 1], [], []>} : vector<8x32xf32>, vector<32x96xf32>, vector<8x96xf32> -> vector<8x96xf32>
    %c0_4 = arith.constant 0 : index
    %c0_5 = arith.constant 0 : index
    %4 = vector.load %arg3[%c0_4, %c0_5] : memref<1x96xf32, #tpu.memory_space<vmem>>, vector<1x96xf32>
    %5 = vector.broadcast %4 : vector<1x96xf32> to vector<8x96xf32>
    %6 = arith.addf %3, %5 : vector<8x96xf32>
    %c0_6 = arith.constant 0 : index
    %c0_7 = arith.constant 0 : index
    %7 = vector.load %arg4[%c0_6, %c0_7] : memref<32x32xf32, #tpu.memory_space<vmem>>, vector<32x32xf32>
    %cst_8 = arith.constant 0.000000e+00 : f32
    %8 = vector.broadcast %cst_8 : f32 to vector<8x32xf32>
    %9 = vector.extract_strided_slice %6 {offsets = [0, 0], sizes = [8, 8], strides = [1, 1]} : vector<8x96xf32> to vector<8x8xf32>
    %10 = vector.extract_strided_slice %6 {offsets = [0, 32], sizes = [8, 8], strides = [1, 1]} : vector<8x96xf32> to vector<8x8xf32>
    %11 = vector.extract_strided_slice %6 {offsets = [0, 64], sizes = [8, 8], strides = [1, 1]} : vector<8x96xf32> to vector<8x8xf32>
    %cst_9 = arith.constant dense<0.000000e+00> : vector<8x8xf32>
    %12 = tpu.matmul %9, %10, %cst_9 {dimension_numbers = #tpu.dot_dimension_numbers<[1], [1], [0], [0], [0, 0, 1, 0], [], []>} : vector<8x8xf32>, vector<8x8xf32>, vector<8x8xf32> -> vector<8x8xf32>
    %cst_10 = arith.constant dense<0xFF800000> : vector<8xf32>
    %13 = vector.multi_reduction <maximumf>, %12, %cst_10 [1] : vector<8x8xf32> to vector<8xf32>
    %14 = vector.shape_cast %13 : vector<8xf32> to vector<8x1xf32>
    %15 = vector.broadcast %14 : vector<8x1xf32> to vector<8x8xf32>
    %16 = arith.subf %12, %15 : vector<8x8xf32>
    %17 = math.exp %16 : vector<8x8xf32>
    %cst_11 = arith.constant dense<0.000000e+00> : vector<8xf32>
    %18 = vector.multi_reduction <add>, %17, %cst_11 [1] : vector<8x8xf32> to vector<8xf32>
    %19 = vector.shape_cast %18 : vector<8xf32> to vector<8x1xf32>
    %cst_12 = arith.constant dense<0.000000e+00> : vector<8x8xf32>
    %20 = tpu.matmul %17, %11, %cst_12 {dimension_numbers = #tpu.dot_dimension_numbers<[1], [0], [0], [1], [0, 0, 1, 1], [], []>} : vector<8x8xf32>, vector<8x8xf32>, vector<8x8xf32> -> vector<8x8xf32>
    %21 = tpu.reciprocal %19 : vector<8x1xf32> -> vector<8x1xf32>
    %22 = vector.broadcast %21 : vector<8x1xf32> to vector<8x8xf32>
    %23 = arith.mulf %20, %22 : vector<8x8xf32>
    %24 = vector.extract_strided_slice %7 {offsets = [0, 0], sizes = [8, 32], strides = [1, 1]} : vector<32x32xf32> to vector<8x32xf32>
    %cst_13 = arith.constant dense<0.000000e+00> : vector<8x32xf32>
    %25 = tpu.matmul %23, %24, %cst_13 {dimension_numbers = #tpu.dot_dimension_numbers<[1], [0], [0], [1], [0, 0, 1, 1], [], []>} : vector<8x8xf32>, vector<8x32xf32>, vector<8x32xf32> -> vector<8x32xf32>
    %26 = arith.addf %8, %25 : vector<8x32xf32>
    %27 = vector.extract_strided_slice %6 {offsets = [0, 8], sizes = [8, 8], strides = [1, 1]} : vector<8x96xf32> to vector<8x8xf32>
    %28 = vector.extract_strided_slice %6 {offsets = [0, 40], sizes = [8, 8], strides = [1, 1]} : vector<8x96xf32> to vector<8x8xf32>
    %29 = vector.extract_strided_slice %6 {offsets = [0, 72], sizes = [8, 8], strides = [1, 1]} : vector<8x96xf32> to vector<8x8xf32>
    %cst_14 = arith.constant dense<0.000000e+00> : vector<8x8xf32>
    %30 = tpu.matmul %27, %28, %cst_14 {dimension_numbers = #tpu.dot_dimension_numbers<[1], [1], [0], [0], [0, 0, 1, 0], [], []>} : vector<8x8xf32>, vector<8x8xf32>, vector<8x8xf32> -> vector<8x8xf32>
    %cst_15 = arith.constant dense<0xFF800000> : vector<8xf32>
    %31 = vector.multi_reduction <maximumf>, %30, %cst_15 [1] : vector<8x8xf32> to vector<8xf32>
    %32 = vector.shape_cast %31 : vector<8xf32> to vector<8x1xf32>
    %33 = vector.broadcast %32 : vector<8x1xf32> to vector<8x8xf32>
    %34 = arith.subf %30, %33 : vector<8x8xf32>
    %35 = math.exp %34 : vector<8x8xf32>
    %cst_16 = arith.constant dense<0.000000e+00> : vector<8xf32>
    %36 = vector.multi_reduction <add>, %35, %cst_16 [1] : vector<8x8xf32> to vector<8xf32>
    %37 = vector.shape_cast %36 : vector<8xf32> to vector<8x1xf32>
    %cst_17 = arith.constant dense<0.000000e+00> : vector<8x8xf32>
    %38 = tpu.matmul %35, %29, %cst_17 {dimension_numbers = #tpu.dot_dimension_numbers<[1], [0], [0], [1], [0, 0, 1, 1], [], []>} : vector<8x8xf32>, vector<8x8xf32>, vector<8x8xf32> -> vector<8x8xf32>
    %39 = tpu.reciprocal %37 : vector<8x1xf32> -> vector<8x1xf32>
    %40 = vector.broadcast %39 : vector<8x1xf32> to vector<8x8xf32>
    %41 = arith.mulf %38, %40 : vector<8x8xf32>
    %42 = vector.extract_strided_slice %7 {offsets = [8, 0], sizes = [8, 32], strides = [1, 1]} : vector<32x32xf32> to vector<8x32xf32>
    %cst_18 = arith.constant dense<0.000000e+00> : vector<8x32xf32>
    %43 = tpu.matmul %41, %42, %cst_18 {dimension_numbers = #tpu.dot_dimension_numbers<[1], [0], [0], [1], [0, 0, 1, 1], [], []>} : vector<8x8xf32>, vector<8x32xf32>, vector<8x32xf32> -> vector<8x32xf32>
    %44 = arith.addf %26, %43 : vector<8x32xf32>
    %45 = vector.extract_strided_slice %6 {offsets = [0, 16], sizes = [8, 8], strides = [1, 1]} : vector<8x96xf32> to vector<8x8xf32>
    %46 = vector.extract_strided_slice %6 {offsets = [0, 48], sizes = [8, 8], strides = [1, 1]} : vector<8x96xf32> to vector<8x8xf32>
    %47 = vector.extract_strided_slice %6 {offsets = [0, 80], sizes = [8, 8], strides = [1, 1]} : vector<8x96xf32> to vector<8x8xf32>
    %cst_19 = arith.constant dense<0.000000e+00> : vector<8x8xf32>
    %48 = tpu.matmul %45, %46, %cst_19 {dimension_numbers = #tpu.dot_dimension_numbers<[1], [1], [0], [0], [0, 0, 1, 0], [], []>} : vector<8x8xf32>, vector<8x8xf32>, vector<8x8xf32> -> vector<8x8xf32>
    %cst_20 = arith.constant dense<0xFF800000> : vector<8xf32>
    %49 = vector.multi_reduction <maximumf>, %48, %cst_20 [1] : vector<8x8xf32> to vector<8xf32>
    %50 = vector.shape_cast %49 : vector<8xf32> to vector<8x1xf32>
    %51 = vector.broadcast %50 : vector<8x1xf32> to vector<8x8xf32>
    %52 = arith.subf %48, %51 : vector<8x8xf32>
    %53 = math.exp %52 : vector<8x8xf32>
    %cst_21 = arith.constant dense<0.000000e+00> : vector<8xf32>
    %54 = vector.multi_reduction <add>, %53, %cst_21 [1] : vector<8x8xf32> to vector<8xf32>
    %55 = vector.shape_cast %54 : vector<8xf32> to vector<8x1xf32>
    %cst_22 = arith.constant dense<0.000000e+00> : vector<8x8xf32>
    %56 = tpu.matmul %53, %47, %cst_22 {dimension_numbers = #tpu.dot_dimension_numbers<[1], [0], [0], [1], [0, 0, 1, 1], [], []>} : vector<8x8xf32>, vector<8x8xf32>, vector<8x8xf32> -> vector<8x8xf32>
    %57 = tpu.reciprocal %55 : vector<8x1xf32> -> vector<8x1xf32>
    %58 = vector.broadcast %57 : vector<8x1xf32> to vector<8x8xf32>
    %59 = arith.mulf %56, %58 : vector<8x8xf32>
    %60 = vector.extract_strided_slice %7 {offsets = [16, 0], sizes = [8, 32], strides = [1, 1]} : vector<32x32xf32> to vector<8x32xf32>
    %cst_23 = arith.constant dense<0.000000e+00> : vector<8x32xf32>
    %61 = tpu.matmul %59, %60, %cst_23 {dimension_numbers = #tpu.dot_dimension_numbers<[1], [0], [0], [1], [0, 0, 1, 1], [], []>} : vector<8x8xf32>, vector<8x32xf32>, vector<8x32xf32> -> vector<8x32xf32>
    %62 = arith.addf %44, %61 : vector<8x32xf32>
    %63 = vector.extract_strided_slice %6 {offsets = [0, 24], sizes = [8, 8], strides = [1, 1]} : vector<8x96xf32> to vector<8x8xf32>
    %64 = vector.extract_strided_slice %6 {offsets = [0, 56], sizes = [8, 8], strides = [1, 1]} : vector<8x96xf32> to vector<8x8xf32>
    %65 = vector.extract_strided_slice %6 {offsets = [0, 88], sizes = [8, 8], strides = [1, 1]} : vector<8x96xf32> to vector<8x8xf32>
    %cst_24 = arith.constant dense<0.000000e+00> : vector<8x8xf32>
    %66 = tpu.matmul %63, %64, %cst_24 {dimension_numbers = #tpu.dot_dimension_numbers<[1], [1], [0], [0], [0, 0, 1, 0], [], []>} : vector<8x8xf32>, vector<8x8xf32>, vector<8x8xf32> -> vector<8x8xf32>
    %cst_25 = arith.constant dense<0xFF800000> : vector<8xf32>
    %67 = vector.multi_reduction <maximumf>, %66, %cst_25 [1] : vector<8x8xf32> to vector<8xf32>
    %68 = vector.shape_cast %67 : vector<8xf32> to vector<8x1xf32>
    %69 = vector.broadcast %68 : vector<8x1xf32> to vector<8x8xf32>
    %70 = arith.subf %66, %69 : vector<8x8xf32>
    %71 = math.exp %70 : vector<8x8xf32>
    %cst_26 = arith.constant dense<0.000000e+00> : vector<8xf32>
    %72 = vector.multi_reduction <add>, %71, %cst_26 [1] : vector<8x8xf32> to vector<8xf32>
    %73 = vector.shape_cast %72 : vector<8xf32> to vector<8x1xf32>
    %cst_27 = arith.constant dense<0.000000e+00> : vector<8x8xf32>
    %74 = tpu.matmul %71, %65, %cst_27 {dimension_numbers = #tpu.dot_dimension_numbers<[1], [0], [0], [1], [0, 0, 1, 1], [], []>} : vector<8x8xf32>, vector<8x8xf32>, vector<8x8xf32> -> vector<8x8xf32>
    %75 = tpu.reciprocal %73 : vector<8x1xf32> -> vector<8x1xf32>
    %76 = vector.broadcast %75 : vector<8x1xf32> to vector<8x8xf32>
    %77 = arith.mulf %74, %76 : vector<8x8xf32>
    %78 = vector.extract_strided_slice %7 {offsets = [24, 0], sizes = [8, 32], strides = [1, 1]} : vector<32x32xf32> to vector<8x32xf32>
    %cst_28 = arith.constant dense<0.000000e+00> : vector<8x32xf32>
    %79 = tpu.matmul %77, %78, %cst_28 {dimension_numbers = #tpu.dot_dimension_numbers<[1], [0], [0], [1], [0, 0, 1, 1], [], []>} : vector<8x8xf32>, vector<8x32xf32>, vector<8x32xf32> -> vector<8x32xf32>
    %80 = arith.addf %62, %79 : vector<8x32xf32>
    %c0_29 = arith.constant 0 : index
    %c0_30 = arith.constant 0 : index
    %81 = vector.load %arg5[%c0_29, %c0_30] : memref<1x32xf32, #tpu.memory_space<vmem>>, vector<1x32xf32>
    %82 = vector.broadcast %81 : vector<1x32xf32> to vector<8x32xf32>
    %83 = arith.addf %80, %82 : vector<8x32xf32>
    %c0_31 = arith.constant 0 : index
    %c0_32 = arith.constant 0 : index
    %c0_33 = arith.constant 0 : index
    %84 = vector.load %arg6[%c0_31, %c0_32, %c0_33] : memref<1x8x32xf32, #tpu.memory_space<vmem>>, vector<1x8x32xf32>
    %85 = vector.shape_cast %84 : vector<1x8x32xf32> to vector<8x32xf32>
    %86 = vector.shape_cast %83 : vector<8x32xf32> to vector<1x8x32xf32>
    tpu.vector_store %arg6[%c0_31, %c0_32, %c0_33], %86 {strides = array<i32>} : memref<1x8x32xf32, #tpu.memory_space<vmem>>, vector<1x8x32xf32>,
    return
  }
  func.func @transform_0(%arg0: i32) -> (i32, i32, i32) {
    %c0_i32 = arith.constant 0 : i32
    %c0_i32_0 = arith.constant 0 : i32
    %c0_i32_1 = arith.constant 0 : i32
    return %arg0, %c0_i32, %c0_i32_0 : i32, i32, i32
  }
  func.func @transform_1(%arg0: i32) -> (i32, i32) {
    %c0_i32 = arith.constant 0 : i32
    %c0_i32_0 = arith.constant 0 : i32
    %c0_i32_1 = arith.constant 0 : i32
    return %c0_i32, %c0_i32_0 : i32, i32
  }
  func.func @transform_2(%arg0: i32) -> (i32, i32) {
    %c0_i32 = arith.constant 0 : i32
    %c0_i32_0 = arith.constant 0 : i32
    %c0_i32_1 = arith.constant 0 : i32
    return %c0_i32, %c0_i32_0 : i32, i32
  }
  func.func @transform_3(%arg0: i32) -> (i32, i32) {
    %c0_i32 = arith.constant 0 : i32
    %c0_i32_0 = arith.constant 0 : i32
    %c0_i32_1 = arith.constant 0 : i32
    return %c0_i32, %c0_i32_0 : i32, i32
  }
  func.func @transform_4(%arg0: i32) -> (i32, i32) {
    %c0_i32 = arith.constant 0 : i32
    %c0_i32_0 = arith.constant 0 : i32
    %c0_i32_1 = arith.constant 0 : i32
    return %c0_i32, %c0_i32_0 : i32, i32
  }
  func.func @transform_5(%arg0: i32) -> (i32, i32, i32) {
    %c0_i32 = arith.constant 0 : i32
    %c0_i32_0 = arith.constant 0 : i32
    %c0_i32_1 = arith.constant 0 : i32
    return %arg0, %c0_i32, %c0_i32_0 : i32, i32, i32
  }
}

</mosaic_0001>

<llo_original>
// kernel: tpu_custom_call.1
$region0: #{tpu_custom_call.1}
  #allocation0 [shape = 'u32[]', space=smem, size = 0x4, offset = 0x4, fixed_abs, tag = 'smem constant byte address 0x4 - core index']
  #allocation1 [shape = 'u32[144,128]{1,0:T(1,128)}', space=vmem, size = 0x12000, scoped, tag = 'internal scratch']
  %s0 = inlined_call_operand.hbm [shape: f32[2,8,32], index: 0, kind: input, shape index: {}]
  %s1 = inlined_call_operand.hbm [shape: f32[32,96], index: 1, kind: input, shape index: {}]
  %s2 = inlined_call_operand.vmem [shape: f32[1,96], index: 2, kind: input, shape index: {}]
  %s3 = inlined_call_operand.hbm [shape: f32[32,32], index: 3, kind: input, shape index: {}]
  %s4 = inlined_call_operand.vmem [shape: f32[1,32], index: 4, kind: input, shape index: {}]
  %s5 = inlined_call_operand.hbm [shape: f32[2,8,32], index: 5, kind: output, shape index: {}]
  %s6 = sld [smem:[#allocation0]]
  $region65: #{tpu_custom_call.1} parent=0
    _
  %s8 = ssub.s32 1, %s6
  %s9 = scalar_select 0, %s8, %s6
  $region1: #{tpu_custom_call.1} parent=0
    #allocation2 [shape = 'u8[8192]{0}', space=vmem, size = 0x2000, scoped, tag = 'input window, operand 0']
    #allocation3 [shape = 's32[2]{0}', space=sflag, size = 0x8, scoped, tag = 'scoped memory for tpu_custom_call.1']
    #allocation4 [shape = 's32[2]{0}', space=sflag, size = 0x8, scoped, tag = 'scoped memory for tpu_custom_call.1']
    #allocation5 [shape = 'u8[16384]{0}', space=vmem, size = 0x4000, scoped, tag = 'input window, operand 1, single buffered']
    #allocation6 [shape = 's32[1]{0}', space=sflag, size = 0x4, scoped, tag = 'scoped memory for tpu_custom_call.1']
    #allocation7 [shape = 'u8[16384]{0}', space=vmem, size = 0x4000, scoped, tag = 'input window, operand 3, single buffered']
    #allocation8 [shape = 'u8[8192]{0}', space=vmem, size = 0x2000, scoped, tag = 'output window, operand 0']
    %10 = vsyncpa [#allocation3], 0
    %s11 = scalar_lea.sflag [#allocation3], 1
    %12 = vsyncpa %s11, 0
    %13 = vsyncpa [#allocation6], 0
    %14 = vsyncpa [#allocation4], 0
    %s15 = scalar_lea.sflag [#allocation4], 1
    %16 = vsyncpa %s15, 0
    loop: start=0, step=1, limit=4
    $region2: #{tpu_custom_call.1} parent=1 // loop_pre_header
      _
    $region3: #{tpu_custom_call.1} parent=1 // loop_header
      %s18 = sphi 0, %s22
      %p19 = scmp.ge.s32.totalorder %s18, 4
      %s28 = sphi 0, %s30
      %s31 = sphi 0, %s28
      %s32 = sphi 0, %s31
      %s48 = sphi 0, %s32
      %s52 = sphi 0, %s52
      %s54 = sphi 0, %s52
      %s55 = sphi 0, %s54
      %s69 = sphi 0, %s55
      %s73 = sphi 0, %s73
      %s75 = sphi 0, %s73
      %s76 = sphi 0, %s75
      %s90 = sphi 0, %s76
      %s94 = sphi 0, %s94
      %s96 = sphi 0, %s94
      %s97 = sphi 0, %s96
      %s111 = sphi 0, %s97
      %s115 = sphi 0, %s115
      %s117 = sphi 0, %s115
      %s118 = sphi 0, %s117
      %s132 = sphi 0, %s118
      %s138 = sphi 0, %s140
      %s141 = sphi 0, %s138
      %s142 = sphi 0, %s141
      %s158 = sphi 0, %s142
    $region4: #{tpu_custom_call.1} parent=1 // loop_header_branch
      %21 = sbr.rel (%p19) target = $region8
    $region5: #{tpu_custom_call.1} parent=1 // loop_body
      %s23 = ssub.s32 %s18, 1
      %s24 = ssub.s32 %s18, 2
      %s25 = sadd.s32 %s18, 1
      %s26 = ssub.s32 %s18, %s25
      %p27 = scmp.eq.s32.totalorder %s26, 0
      %s29 = sadd.s32 %s28, 1
      %s30 = scalar_select %p27, %s28, %s29
      %p33 = pneg %p27
      %p34 = scmp.eq.s32.totalorder %s18, 1
      %p35 = por %p33, %p34
      %p36 = scmp.ne.s32.totalorder %s28, %s31
      %p37 = scmp.eq.s32.totalorder %s18, 0
      %p38 = por %p36, %p37
      %p39 = scmp.ne.s32.totalorder %s28, %s31
      %p40 = scmp.eq.s32.totalorder %s23, 1
      %p41 = por %p39, %p40
      %p42 = scmp.ne.s32.totalorder %s31, %s32
      %p43 = scmp.eq.s32.totalorder %s23, 0
      %p44 = por %p42, %p43
      %p45 = scmp.ne.s32.totalorder %s31, %s32
      %p46 = scmp.eq.s32.totalorder %s24, 1
      %p47 = por %p45, %p46
      %p49 = scmp.ne.s32.totalorder %s32, %s48
      %p50 = scmp.eq.s32.totalorder %s24, 0
      %p51 = por %p49, %p50
      %s53 = sadd.s32 %s52, 1
      %p56 = scmp.eq.s32.totalorder %s18, 1
      %p57 = scmp.ne.s32.totalorder %s52, %s54
      %p58 = scmp.eq.s32.totalorder %s18, 0
      %p59 = por %p57, %p58
      %p60 = scmp.ne.s32.totalorder %s52, %s54
      %p61 = scmp.eq.s32.totalorder %s23, 1
      %p62 = por %p60, %p61
      %p63 = scmp.ne.s32.totalorder %s54, %s55
      %p64 = scmp.eq.s32.totalorder %s23, 0
      %p65 = por %p63, %p64
      %p66 = scmp.ne.s32.totalorder %s54, %s55
      %p67 = scmp.eq.s32.totalorder %s24, 1
      %p68 = por %p66, %p67
      %p70 = scmp.ne.s32.totalorder %s55, %s69
      %p71 = scmp.eq.s32.totalorder %s24, 0
      %p72 = por %p70, %p71
      %s74 = sadd.s32 %s73, 1
      %p77 = scmp.eq.s32.totalorder %s18, 1
      %p78 = scmp.ne.s32.totalorder %s73, %s75
      %p79 = scmp.eq.s32.totalorder %s18, 0
      %p80 = por %p78, %p79
      %p81 = scmp.ne.s32.totalorder %s73, %s75
      %p82 = scmp.eq.s32.totalorder %s23, 1
      %p83 = por %p81, %p82
      %p84 = scmp.ne.s32.totalorder %s75, %s76
      %p85 = scmp.eq.s32.totalorder %s23, 0
      %p86 = por %p84, %p85
      %p87 = scmp.ne.s32.totalorder %s75, %s76
      %p88 = scmp.eq.s32.totalorder %s24, 1
      %p89 = por %p87, %p88
      %p91 = scmp.ne.s32.totalorder %s76, %s90
      %p92 = scmp.eq.s32.totalorder %s24, 0
      %p93 = por %p91, %p92
      %s95 = sadd.s32 %s94, 1
      %p98 = scmp.eq.s32.totalorder %s18, 1
      %p99 = scmp.ne.s32.totalorder %s94, %s96
      %p100 = scmp.eq.s32.totalorder %s18, 0
      %p101 = por %p99, %p100
      %p102 = scmp.ne.s32.totalorder %s94, %s96
      %p103 = scmp.eq.s32.totalorder %s23, 1
      %p104 = por %p102, %p103
      %p105 = scmp.ne.s32.totalorder %s96, %s97
      %p106 = scmp.eq.s32.totalorder %s23, 0
      %p107 = por %p105, %p106
      %p108 = scmp.ne.s32.totalorder %s96, %s97
      %p109 = scmp.eq.s32.totalorder %s24, 1
      %p110 = por %p108, %p109
      %p112 = scmp.ne.s32.totalorder %s97, %s111
      %p113 = scmp.eq.s32.totalorder %s24, 0
      %p114 = por %p112, %p113
      %s116 = sadd.s32 %s115, 1
      %p119 = scmp.eq.s32.totalorder %s18, 1
      %p120 = scmp.ne.s32.totalorder %s115, %s117
      %p121 = scmp.eq.s32.totalorder %s18, 0
      %p122 = por %p120, %p121
      %p123 = scmp.ne.s32.totalorder %s115, %s117
      %p124 = scmp.eq.s32.totalorder %s23, 1
      %p125 = por %p123, %p124
      %p126 = scmp.ne.s32.totalorder %s117, %s118
      %p127 = scmp.eq.s32.totalorder %s23, 0
      %p128 = por %p126, %p127
      %p129 = scmp.ne.s32.totalorder %s117, %s118
      %p130 = scmp.eq.s32.totalorder %s24, 1
      %p131 = por %p129, %p130
      %p133 = scmp.ne.s32.totalorder %s118, %s132
      %p134 = scmp.eq.s32.totalorder %s24, 0
      %p135 = por %p133, %p134
      %s136 = ssub.s32 %s18, %s25
      %p137 = scmp.eq.s32.totalorder %s136, 0
      %s139 = sadd.s32 %s138, 1
      %s140 = scalar_select %p137, %s138, %s139
      %p143 = pneg %p137
      %p144 = scmp.eq.s32.totalorder %s18, 1
      %p145 = por %p143, %p144
      %p146 = scmp.ne.s32.totalorder %s138, %s141
      %p147 = scmp.eq.s32.totalorder %s18, 0
      %p148 = por %p146, %p147
      %p149 = scmp.ne.s32.totalorder %s138, %s141
      %p150 = scmp.eq.s32.totalorder %s23, 1
      %p151 = por %p149, %p150
      %p152 = scmp.ne.s32.totalorder %s141, %s142
      %p153 = scmp.eq.s32.totalorder %s23, 0
      %p154 = por %p152, %p153
      %p155 = scmp.ne.s32.totalorder %s141, %s142
      %p156 = scmp.eq.s32.totalorder %s24, 1
      %p157 = por %p155, %p156
      %p159 = scmp.ne.s32.totalorder %s142, %s158
      %p160 = scmp.eq.s32.totalorder %s24, 0
      %p161 = por %p159, %p160
      %p162 = scmp.le.s32.totalorder 1, %s18
      %p163 = scmp.lt.s32.totalorder %s18, 3
      %p164 = pnand %p162, %p163
      %p165 = pneg %p164
      // Predicated region
      $region9: #{tpu_custom_call.1} parent=5 // pred_check
        _
      $region10: #{tpu_custom_call.1} parent=5 // pred_check_branch
        %167 = sbr.rel (%p164) target = $region12
      $region11: #{tpu_custom_call.1} parent=5 // pred_region
        %s168 = ssub.s32 %s18, 1
        // Predicated region
        $region13: #{tpu_custom_call.1} parent=11 // pred_check
          %p169 = pneg %p65
        $region14: #{tpu_custom_call.1} parent=11 // pred_check_branch
          %171 = sbr.rel (%p169) target = $region16
        $region15: #{tpu_custom_call.1} parent=11 // pred_region
          %s173 = ssub.s32 512, 512
          %174 = vsyncadd [#allocation6], %s173
          %s175 = sshll.u32 [#allocation5], 4
          %s176 = int_to_ptr.vmem [resolvable:$true] %s175
          %181 = dma.hbm_to_vmem [thread:$0]  %s1, 512, %s176, [#allocation6], 128, 128, 8
        $region16: #{tpu_custom_call.1} parent=11 // pred_fallthru
          _
        // Predicated region
        $region17: #{tpu_custom_call.1} parent=11 // pred_check
          %p182 = pneg %p86
        $region18: #{tpu_custom_call.1} parent=11 // pred_check_branch
          %184 = sbr.rel (%p182) target = $region20
        $region19: #{tpu_custom_call.1} parent=11 // pred_region
          _
        $region20: #{tpu_custom_call.1} parent=11 // pred_fallthru
          _
        // Predicated region
        $region21: #{tpu_custom_call.1} parent=11 // pred_check
          %p185 = pneg %p107
        $region22: #{tpu_custom_call.1} parent=11 // pred_check_branch
          %187 = sbr.rel (%p185) target = $region24
        $region23: #{tpu_custom_call.1} parent=11 // pred_region
          %s189 = ssub.s32 512, 512
          %190 = vsyncadd [#allocation6], %s189
          %s191 = sshll.u32 [#allocation7], 4
          %s192 = int_to_ptr.vmem [resolvable:$true] %s191
          %197 = dma.hbm_to_vmem [thread:$0]  %s3, 512, %s192, [#allocation6], 128, 128, 8
        $region24: #{tpu_custom_call.1} parent=11 // pred_fallthru
          _
        // Predicated region
        $region25: #{tpu_custom_call.1} parent=11 // pred_check
          %p198 = pneg %p128
        $region26: #{tpu_custom_call.1} parent=11 // pred_check_branch
          %200 = sbr.rel (%p198) target = $region28
        $region27: #{tpu_custom_call.1} parent=11 // pred_region
          _
        $region28: #{tpu_custom_call.1} parent=11 // pred_fallthru
          _
      $region12: #{tpu_custom_call.1} parent=5 // pred_fallthru
        _
      %p201 = scmp.lt.s32.totalorder %s18, 2
      // Predicated region
      $region29: #{tpu_custom_call.1} parent=5 // pred_check
        %p202 = pneg %p201
      $region30: #{tpu_custom_call.1} parent=5 // pred_check_branch
        %204 = sbr.rel (%p202) target = $region32
      $region31: #{tpu_custom_call.1} parent=5 // pred_region
        // Predicated region
        $region33: #{tpu_custom_call.1} parent=31 // pred_check
          %p205 = pneg %p38
        $region34: #{tpu_custom_call.1} parent=31 // pred_check_branch
          %207 = sbr.rel (%p205) target = $region36
        $region35: #{tpu_custom_call.1} parent=31 // pred_region
          %s208 = sand.u32 %s28, 1
          %s209 = scalar_lea.sflag [#allocation3], %s208
          %s210 = sand.u32 %s28, 1
          %s211 = smul.addr %s210, 8
          %s212 = scalar_lea.vmem [#allocation2], %s211
          %s214 = ssub.s32 128, 128
          %215 = vsyncadd %s209, %s214
          %s216 = smul.addr %s18, 128
          %s217 = scalar_lea.hbm %s0, %s216
          %s219 = sshll.u32 %s212, 4
          %s220 = int_to_ptr.vmem [resolvable:$true] %s219
          %222 = dma.hbm_to_vmem [thread:$0]  %s217, 128, %s220, %s209
        $region36: #{tpu_custom_call.1} parent=31 // pred_fallthru
          _
      $region32: #{tpu_custom_call.1} parent=5 // pred_fallthru
        _
      %p223 = scmp.le.s32.totalorder 1, %s18
      %p224 = scmp.lt.s32.totalorder %s18, 3
      %p225 = pnand %p223, %p224
      %p226 = pneg %p225
      // Predicated region
      $region37: #{tpu_custom_call.1} parent=5 // pred_check
        _
      $region38: #{tpu_custom_call.1} parent=5 // pred_check_branch
        %228 = sbr.rel (%p225) target = $region40
      $region39: #{tpu_custom_call.1} parent=5 // pred_region
        %s229 = ssub.s32 %s18, 1
        %s230 = sand.u32 %s31, 1
        %s231 = scalar_lea.sflag [#allocation3], %s230
        %s232 = sand.u32 %s31, 1
        %s233 = smul.addr %s232, 8
        %s234 = scalar_lea.vmem [#allocation2], %s233
        // Predicated region
        $region41: #{tpu_custom_call.1} parent=39 // pred_check
          %p235 = pneg %p44
        $region42: #{tpu_custom_call.1} parent=39 // pred_check_branch
          %237 = sbr.rel (%p235) target = $region44
        $region43: #{tpu_custom_call.1} parent=39 // pred_region
          %238 = dma.done %s231, 128
        $region44: #{tpu_custom_call.1} parent=39 // pred_fallthru
          _
        // Predicated region
        $region45: #{tpu_custom_call.1} parent=39 // pred_check
          %p239 = pneg %p65
        $region46: #{tpu_custom_call.1} parent=39 // pred_check_branch
          %241 = sbr.rel (%p239) target = $region48
        $region47: #{tpu_custom_call.1} parent=39 // pred_region
          %242 = dma.done [#allocation6], 512
        $region48: #{tpu_custom_call.1} parent=39 // pred_fallthru
          _
        // Predicated region
        $region49: #{tpu_custom_call.1} parent=39 // pred_check
          %p243 = pneg %p107
        $region50: #{tpu_custom_call.1} parent=39 // pred_check_branch
          %245 = sbr.rel (%p243) target = $region52
        $region51: #{tpu_custom_call.1} parent=39 // pred_region
          %246 = dma.done [#allocation6], 512
        $region52: #{tpu_custom_call.1} parent=39 // pred_fallthru
          _
        %s247 = sand.u32 %s31, 1
        %s248 = scalar_lea.sflag [#allocation3], %s247
        %s249 = sand.u32 %s31, 1
        %s250 = smul.addr %s249, 8
        %s251 = scalar_lea.vmem [#allocation2], %s250
        %p252 = pneg %p44
        %p253 = pneg %p41
        %p254 = pneg %p65
        %p255 = pneg %p62
        %p256 = pneg %p86
        %p257 = pneg %p83
        %p258 = pneg %p107
        %p259 = pneg %p104
        %p260 = pneg %p128
        %p261 = pneg %p125
        %p262 = pneg %p154
        %p263 = pneg %p151
        %s264 = sand.u32 %s141, 1
        %s265 = scalar_lea.sflag [#allocation4], %s264
        %s266 = sand.u32 %s141, 1
        %s267 = smul.addr %s266, 8
        %s268 = scalar_lea.vmem [#allocation8], %s267
        %v269 = vld [vmem:[%s234] sm:$0xff]
        %v270 = vld [vmem:[#allocation5] sm:$0xff]
        %v271 = vld [vmem:[#allocation5 + $0x8] sm:$0xff]
        %v272 = vld [vmem:[#allocation5 + $0x10] sm:$0xff]
        %v273 = vld [vmem:[#allocation5 + $0x18] sm:$0xff]
        %v274 = vld [vmem:[%s2] sm:$0x1]
        %v276 = vlaneseq
        %v277 = vshrl.u32 %v276, 7
        %v278 = vsub.s32 0, %v277
        %v279 = vrot.slane %v274, %v278
        %vm281 = vcmask 261120
        %v283 = vsel %vm281, %v269, 0
        %285 = vmatprep.subr.mxu0 0.0
        %286 = vmatpush1.msra.mxu0 0.0
        %287 = vmatprep.subr.mxu0 0.0
        %288 = vmatpush1.msra.mxu0 0.0
        %289 = vmatprep.subr.mxu0 0.0
        %290 = vmatpush1.msra.mxu0 0.0
        %291 = vmatprep.subr.mxu0 0.0
        %292 = vmatpush1.msra.mxu0 0.0
        %293 = vmatprep.subr.mxu0 0.0
        %294 = vmatpush1.msra.mxu0 0.0
        %295 = vmatprep.subr.mxu0 0.0
        %296 = vmatpush1.msra.mxu0 0.0
        %297 = vmatprep.subr.mxu0 0.0
        %298 = vmatpush1.msra.mxu0 0.0
        %299 = vmatprep.subr.mxu0 0.0
        %300 = vmatpush1.msra.mxu0 0.0
        %301 = vmatprep.subr.mxu0 0.0
        %302 = vmatpush1.msra.mxu0 0.0
        %303 = vmatprep.subr.mxu0 0.0
        %304 = vmatpush1.msra.mxu0 0.0
        %305 = vmatprep.subr.mxu0 0.0
        %306 = vmatpush1.msra.mxu0 0.0
        %307 = vmatprep.subr.mxu0 0.0
        %308 = vmatpush1.msra.mxu0 0.0
        %309 = vmatprep.subr.mxu0 0.0
        %310 = vmatpush1.msra.mxu0 %v273
        %311 = vmatprep.subr.mxu0 0.0
        %312 = vmatpush1.msra.mxu0 %v272
        %313 = vmatprep.subr.mxu0 0.0
        %314 = vmatpush1.msra.mxu0 %v271
        %315 = vmatprep.subr.mxu0 0.0
        %316 = vmatpush1.msra.mxu0 %v270
        %317 = vmatprep.subr.mxu0 0.0
        %318 = vmatpush2.msra.mxu0 0.0
        %319 = vmatprep.subr.mxu0 0.0
        %320 = vmatpush2.msra.mxu0 0.0
        %321 = vmatprep.subr.mxu0 0.0
        %322 = vmatpush2.msra.mxu0 0.0
        %323 = vmatprep.subr.mxu0 0.0
        %324 = vmatpush2.msra.mxu0 0.0
        %325 = vmatprep.subr.mxu0 0.0
        %326 = vmatpush2.msra.mxu0 0.0
        %327 = vmatprep.subr.mxu0 0.0
        %328 = vmatpush2.msra.mxu0 0.0
        %329 = vmatprep.subr.mxu0 0.0
        %330 = vmatpush2.msra.mxu0 0.0
        %331 = vmatprep.subr.mxu0 0.0
        %332 = vmatpush2.msra.mxu0 0.0
        %333 = vmatprep.subr.mxu0 0.0
        %334 = vmatpush2.msra.mxu0 0.0
        %335 = vmatprep.subr.mxu0 0.0
        %336 = vmatpush2.msra.mxu0 0.0
        %337 = vmatprep.subr.mxu0 0.0
        %338 = vmatpush2.msra.mxu0 0.0
        %339 = vmatprep.subr.mxu0 0.0
        %340 = vmatpush2.msra.mxu0 0.0
        %341 = vmatprep.subr.mxu0 0.0
        %342 = vmatpush2.msra.mxu0 0.0
        %343 = vmatprep.subr.mxu0 0.0
        %344 = vmatpush2.msra.mxu0 0.0
        %345 = vmatprep.subr.mxu0 0.0
        %346 = vmatpush2.msra.mxu0 0.0
        %347 = vmatprep.subr.mxu0 0.0
        %348 = vmatpush2.msra.mxu0 0.0
        %349 = vmatprep.mubr.f32.mxu0 0.0
        %350 = vmatmul.mubr.f32.gmra.mxu0 %v283
        %v351 = vpop.f32.mrf.mxu0
        %v352 = vadd.f32 %v279, %v351
        %v353 = vpop.f32.mrf.mxu0
        %354 = vdwg.mxu0
        %v355 = vld [vmem:[#allocation7] sm:$0xff]
        %v356 = vld [vmem:[#allocation7 + $0x8] sm:$0xff]
        %v357 = vld [vmem:[#allocation7 + $0x10] sm:$0xff]
        %v358 = vld [vmem:[#allocation7 + $0x18] sm:$0xff]
        %360 = vrot.lane.b32.xlu0 %v352, 96
        %v361 = vpop.permute.xlu0 %360
        %vm362 = vcmask 64512
        %v363 = vsel %vm362, %v352, 0
        %v365 = vsel %vm362, %v361, 0
        %367 = vmatprep.subr.mxu0 0.0
        %368 = vmatpush1.xpose.msra.mxu0 0.0
        %369 = vmatprep.subr.mxu0 0.0
        %370 = vmatpush1.xpose.msra.mxu0 0.0
        %371 = vmatprep.subr.mxu0 0.0
        %372 = vmatpush1.xpose.msra.mxu0 0.0
        %373 = vmatprep.subr.mxu0 0.0
        %374 = vmatpush1.xpose.msra.mxu0 0.0
        %375 = vmatprep.subr.mxu0 0.0
        %376 = vmatpush1.xpose.msra.mxu0 0.0
        %377 = vmatprep.subr.mxu0 0.0
        %378 = vmatpush1.xpose.msra.mxu0 0.0
        %379 = vmatprep.subr.mxu0 0.0
        %380 = vmatpush1.xpose.msra.mxu0 0.0
        %381 = vmatprep.subr.mxu0 0.0
        %382 = vmatpush1.xpose.msra.mxu0 0.0
        %383 = vmatprep.subr.mxu0 0.0
        %384 = vmatpush1.xpose.msra.mxu0 0.0
        %385 = vmatprep.subr.mxu0 0.0
        %386 = vmatpush1.xpose.msra.mxu0 0.0
        %387 = vmatprep.subr.mxu0 0.0
        %388 = vmatpush1.xpose.msra.mxu0 0.0
        %389 = vmatprep.subr.mxu0 0.0
        %390 = vmatpush1.xpose.msra.mxu0 0.0
        %391 = vmatprep.subr.mxu0 0.0
        %392 = vmatpush1.xpose.msra.mxu0 0.0
        %393 = vmatprep.subr.mxu0 0.0
        %394 = vmatpush1.xpose.msra.mxu0 0.0
        %395 = vmatprep.subr.mxu0 0.0
        %396 = vmatpush1.xpose.msra.mxu0 0.0
        %397 = vmatprep.subr.mxu0 0.0
        %398 = vmatpush1.xpose.msra.mxu0 %v365
        %399 = vmatprep.subr.mxu0 0.0
        %400 = vmatpush2.xpose.msra.mxu0 0.0
        %401 = vmatprep.subr.mxu0 0.0
        %402 = vmatpush2.xpose.msra.mxu0 0.0
        %403 = vmatprep.subr.mxu0 0.0
        %404 = vmatpush2.xpose.msra.mxu0 0.0
        %405 = vmatprep.subr.mxu0 0.0
        %406 = vmatpush2.xpose.msra.mxu0 0.0
        %407 = vmatprep.subr.mxu0 0.0
        %408 = vmatpush2.xpose.msra.mxu0 0.0
        %409 = vmatprep.subr.mxu0 0.0
        %410 = vmatpush2.xpose.msra.mxu0 0.0
        %411 = vmatprep.subr.mxu0 0.0
        %412 = vmatpush2.xpose.msra.mxu0 0.0
        %413 = vmatprep.subr.mxu0 0.0
        %414 = vmatpush2.xpose.msra.mxu0 0.0
        %415 = vmatprep.subr.mxu0 0.0
        %416 = vmatpush2.xpose.msra.mxu0 0.0
        %417 = vmatprep.subr.mxu0 0.0
        %418 = vmatpush2.xpose.msra.mxu0 0.0
        %419 = vmatprep.subr.mxu0 0.0
        %420 = vmatpush2.xpose.msra.mxu0 0.0
        %421 = vmatprep.subr.mxu0 0.0
        %422 = vmatpush2.xpose.msra.mxu0 0.0
        %423 = vmatprep.subr.mxu0 0.0
        %424 = vmatpush2.xpose.msra.mxu0 0.0
        %425 = vmatprep.subr.mxu0 0.0
        %426 = vmatpush2.xpose.msra.mxu0 0.0
        %427 = vmatprep.subr.mxu0 0.0
        %428 = vmatpush2.xpose.msra.mxu0 0.0
        %429 = vmatprep.subr.mxu0 0.0
        %430 = vmatpush2.xpose.msra.mxu0 0.0
        %431 = vmatprep.mubr.f32.mxu0 0.0
        %432 = vmatmul.mubr.f32.gmra.mxu0 %v363
        %v433 = vpop.f32.mrf.mxu0
        %v434 = vadd.f32 0.0, %v433
        %v435 = vpop.f32.mrf.mxu0
        %436 = vdwg.mxu0
        %v437 = vsel %vm362, %v434, -inf
        %438 = vmax.xlane.f32.xlu0 %v437
        %v439 = vpop.xlane.xlu0 %438
        %v440 = vsub.f32 %v434, %v439
        %v441 = vmul.f32 %v440, 1.442695
        %v442 = vpow.pop %v441
        %v443 = vsel %vm362, %v442, 0.0
        %444 = vadd.xlane.f32.xlu0 %v443
        %v445 = vpop.xlane.xlu0 %444
        %446 = vrot.lane.b32.xlu0 %v352, 64
        %v447 = vpop.permute.xlu0 %446
        %v450 = vsel %vm362, %v442, 0
        %452 = vmatprep.subr.mxu0 0.0
        %453 = vmatpush1.msra.mxu0 0.0
        %454 = vmatprep.subr.mxu0 0.0
        %455 = vmatpush1.msra.mxu0 0.0
        %456 = vmatprep.subr.mxu0 0.0
        %457 = vmatpush1.msra.mxu0 0.0
        %458 = vmatprep.subr.mxu0 0.0
        %459 = vmatpush1.msra.mxu0 0.0
        %460 = vmatprep.subr.mxu0 0.0
        %461 = vmatpush1.msra.mxu0 0.0
        %462 = vmatprep.subr.mxu0 0.0
        %463 = vmatpush1.msra.mxu0 0.0
        %464 = vmatprep.subr.mxu0 0.0
        %465 = vmatpush1.msra.mxu0 0.0
        %466 = vmatprep.subr.mxu0 0.0
        %467 = vmatpush1.msra.mxu0 0.0
        %468 = vmatprep.subr.mxu0 0.0
        %469 = vmatpush1.msra.mxu0 0.0
        %470 = vmatprep.subr.mxu0 0.0
        %471 = vmatpush1.msra.mxu0 0.0
        %472 = vmatprep.subr.mxu0 0.0
        %473 = vmatpush1.msra.mxu0 0.0
        %474 = vmatprep.subr.mxu0 0.0
        %475 = vmatpush1.msra.mxu0 0.0
        %476 = vmatprep.subr.mxu0 0.0
        %477 = vmatpush1.msra.mxu0 0.0
        %478 = vmatprep.subr.mxu0 0.0
        %479 = vmatpush1.msra.mxu0 0.0
        %480 = vmatprep.subr.mxu0 0.0
        %481 = vmatpush1.msra.mxu0 0.0
        %482 = vmatprep.subr.mxu0 0.0
        %483 = vmatpush1.msra.mxu0 %v447
        %484 = vmatprep.subr.mxu0 0.0
        %485 = vmatpush2.msra.mxu0 0.0
        %486 = vmatprep.subr.mxu0 0.0
        %487 = vmatpush2.msra.mxu0 0.0
        %488 = vmatprep.subr.mxu0 0.0
        %489 = vmatpush2.msra.mxu0 0.0
        %490 = vmatprep.subr.mxu0 0.0
        %491 = vmatpush2.msra.mxu0 0.0
        %492 = vmatprep.subr.mxu0 0.0
        %493 = vmatpush2.msra.mxu0 0.0
        %494 = vmatprep.subr.mxu0 0.0
        %495 = vmatpush2.msra.mxu0 0.0
        %496 = vmatprep.subr.mxu0 0.0
        %497 = vmatpush2.msra.mxu0 0.0
        %498 = vmatprep.subr.mxu0 0.0
        %499 = vmatpush2.msra.mxu0 0.0
        %500 = vmatprep.subr.mxu0 0.0
        %501 = vmatpush2.msra.mxu0 0.0
        %502 = vmatprep.subr.mxu0 0.0
        %503 = vmatpush2.msra.mxu0 0.0
        %504 = vmatprep.subr.mxu0 0.0
        %505 = vmatpush2.msra.mxu0 0.0
        %506 = vmatprep.subr.mxu0 0.0
        %507 = vmatpush2.msra.mxu0 0.0
        %508 = vmatprep.subr.mxu0 0.0
        %509 = vmatpush2.msra.mxu0 0.0
        %510 = vmatprep.subr.mxu0 0.0
        %511 = vmatpush2.msra.mxu0 0.0
        %512 = vmatprep.subr.mxu0 0.0
        %513 = vmatpush2.msra.mxu0 0.0
        %514 = vmatprep.subr.mxu0 0.0
        %515 = vmatpush2.msra.mxu0 0.0
        %516 = vmatprep.mubr.f32.mxu0 0.0
        %517 = vmatmul.mubr.f32.gmra.mxu0 %v450
        %v518 = vpop.f32.mrf.mxu0
        %v519 = vadd.f32 0.0, %v518
        %v520 = vpop.f32.mrf.mxu0
        %521 = vdwg.mxu0
        %v522 = vrcp.pop %v445
        %v523 = vmul.f32 %v519, %v522
        %524 = vrot.lane.b32.xlu0 %v352, 120
        %v525 = vpop.permute.xlu0 %524
        %526 = vrot.lane.b32.xlu0 %v352, 88
        %v527 = vpop.permute.xlu0 %526
        %v528 = vsel %vm362, %v525, 0
        %v530 = vsel %vm362, %v527, 0
        %532 = vmatprep.subr.mxu0 0.0
        %533 = vmatpush1.xpose.msra.mxu0 0.0
        %534 = vmatprep.subr.mxu0 0.0
        %535 = vmatpush1.xpose.msra.mxu0 0.0
        %536 = vmatprep.subr.mxu0 0.0
        %537 = vmatpush1.xpose.msra.mxu0 0.0
        %538 = vmatprep.subr.mxu0 0.0
        %539 = vmatpush1.xpose.msra.mxu0 0.0
        %540 = vmatprep.subr.mxu0 0.0
        %541 = vmatpush1.xpose.msra.mxu0 0.0
        %542 = vmatprep.subr.mxu0 0.0
        %543 = vmatpush1.xpose.msra.mxu0 0.0
        %544 = vmatprep.subr.mxu0 0.0
        %545 = vmatpush1.xpose.msra.mxu0 0.0
        %546 = vmatprep.subr.mxu0 0.0
        %547 = vmatpush1.xpose.msra.mxu0 0.0
        %548 = vmatprep.subr.mxu0 0.0
        %549 = vmatpush1.xpose.msra.mxu0 0.0
        %550 = vmatprep.subr.mxu0 0.0
        %551 = vmatpush1.xpose.msra.mxu0 0.0
        %552 = vmatprep.subr.mxu0 0.0
        %553 = vmatpush1.xpose.msra.mxu0 0.0
        %554 = vmatprep.subr.mxu0 0.0
        %555 = vmatpush1.xpose.msra.mxu0 0.0
        %556 = vmatprep.subr.mxu0 0.0
        %557 = vmatpush1.xpose.msra.mxu0 0.0
        %558 = vmatprep.subr.mxu0 0.0
        %559 = vmatpush1.xpose.msra.mxu0 0.0
        %560 = vmatprep.subr.mxu0 0.0
        %561 = vmatpush1.xpose.msra.mxu0 0.0
        %562 = vmatprep.subr.mxu0 0.0
        %563 = vmatpush1.xpose.msra.mxu0 %v530
        %564 = vmatprep.subr.mxu0 0.0
        %565 = vmatpush2.xpose.msra.mxu0 0.0
        %566 = vmatprep.subr.mxu0 0.0
        %567 = vmatpush2.xpose.msra.mxu0 0.0
        %568 = vmatprep.subr.mxu0 0.0
        %569 = vmatpush2.xpose.msra.mxu0 0.0
        %570 = vmatprep.subr.mxu0 0.0
        %571 = vmatpush2.xpose.msra.mxu0 0.0
        %572 = vmatprep.subr.mxu0 0.0
        %573 = vmatpush2.xpose.msra.mxu0 0.0
        %574 = vmatprep.subr.mxu0 0.0
        %575 = vmatpush2.xpose.msra.mxu0 0.0
        %576 = vmatprep.subr.mxu0 0.0
        %577 = vmatpush2.xpose.msra.mxu0 0.0
        %578 = vmatprep.subr.mxu0 0.0
        %579 = vmatpush2.xpose.msra.mxu0 0.0
        %580 = vmatprep.subr.mxu0 0.0
        %581 = vmatpush2.xpose.msra.mxu0 0.0
        %582 = vmatprep.subr.mxu0 0.0
        %583 = vmatpush2.xpose.msra.mxu0 0.0
        %584 = vmatprep.subr.mxu0 0.0
        %585 = vmatpush2.xpose.msra.mxu0 0.0
        %586 = vmatprep.subr.mxu0 0.0
        %587 = vmatpush2.xpose.msra.mxu0 0.0
        %588 = vmatprep.subr.mxu0 0.0
        %589 = vmatpush2.xpose.msra.mxu0 0.0
        %590 = vmatprep.subr.mxu0 0.0
        %591 = vmatpush2.xpose.msra.mxu0 0.0
        %592 = vmatprep.subr.mxu0 0.0
        %593 = vmatpush2.xpose.msra.mxu0 0.0
        %594 = vmatprep.subr.mxu0 0.0
        %595 = vmatpush2.xpose.msra.mxu0 0.0
        %596 = vmatprep.mubr.f32.mxu0 0.0
        %597 = vmatmul.mubr.f32.gmra.mxu0 %v528
        %v598 = vpop.f32.mrf.mxu0
        %v599 = vadd.f32 0.0, %v598
        %v600 = vpop.f32.mrf.mxu0
        %601 = vdwg.mxu0
        %v602 = vsel %vm362, %v599, -inf
        %603 = vmax.xlane.f32.xlu0 %v602
        %v604 = vpop.xlane.xlu0 %603
        %v605 = vsub.f32 %v599, %v604
        %v606 = vmul.f32 %v605, 1.442695
        %v607 = vpow.pop %v606
        %v608 = vsel %vm362, %v607, 0.0
        %609 = vadd.xlane.f32.xlu0 %v608
        %v610 = vpop.xlane.xlu0 %609
        %611 = vrot.lane.b32.xlu0 %v352, 56
        %v612 = vpop.permute.xlu0 %611
        %v615 = vsel %vm362, %v607, 0
        %617 = vmatprep.subr.mxu0 0.0
        %618 = vmatpush1.msra.mxu0 0.0
        %619 = vmatprep.subr.mxu0 0.0
        %620 = vmatpush1.msra.mxu0 0.0
        %621 = vmatprep.subr.mxu0 0.0
        %622 = vmatpush1.msra.mxu0 0.0
        %623 = vmatprep.subr.mxu0 0.0
        %624 = vmatpush1.msra.mxu0 0.0
        %625 = vmatprep.subr.mxu0 0.0
        %626 = vmatpush1.msra.mxu0 0.0
        %627 = vmatprep.subr.mxu0 0.0
        %628 = vmatpush1.msra.mxu0 0.0
        %629 = vmatprep.subr.mxu0 0.0
        %630 = vmatpush1.msra.mxu0 0.0
        %631 = vmatprep.subr.mxu0 0.0
        %632 = vmatpush1.msra.mxu0 0.0
        %633 = vmatprep.subr.mxu0 0.0
        %634 = vmatpush1.msra.mxu0 0.0
        %635 = vmatprep.subr.mxu0 0.0
        %636 = vmatpush1.msra.mxu0 0.0
        %637 = vmatprep.subr.mxu0 0.0
        %638 = vmatpush1.msra.mxu0 0.0
        %639 = vmatprep.subr.mxu0 0.0
        %640 = vmatpush1.msra.mxu0 0.0
        %641 = vmatprep.subr.mxu0 0.0
        %642 = vmatpush1.msra.mxu0 0.0
        %643 = vmatprep.subr.mxu0 0.0
        %644 = vmatpush1.msra.mxu0 0.0
        %645 = vmatprep.subr.mxu0 0.0
        %646 = vmatpush1.msra.mxu0 0.0
        %647 = vmatprep.subr.mxu0 0.0
        %648 = vmatpush1.msra.mxu0 %v612
        %649 = vmatprep.subr.mxu0 0.0
        %650 = vmatpush2.msra.mxu0 0.0
        %651 = vmatprep.subr.mxu0 0.0
        %652 = vmatpush2.msra.mxu0 0.0
        %653 = vmatprep.subr.mxu0 0.0
        %654 = vmatpush2.msra.mxu0 0.0
        %655 = vmatprep.subr.mxu0 0.0
        %656 = vmatpush2.msra.mxu0 0.0
        %657 = vmatprep.subr.mxu0 0.0
        %658 = vmatpush2.msra.mxu0 0.0
        %659 = vmatprep.subr.mxu0 0.0
        %660 = vmatpush2.msra.mxu0 0.0
        %661 = vmatprep.subr.mxu0 0.0
        %662 = vmatpush2.msra.mxu0 0.0
        %663 = vmatprep.subr.mxu0 0.0
        %664 = vmatpush2.msra.mxu0 0.0
        %665 = vmatprep.subr.mxu0 0.0
        %666 = vmatpush2.msra.mxu0 0.0
        %667 = vmatprep.subr.mxu0 0.0
        %668 = vmatpush2.msra.mxu0 0.0
        %669 = vmatprep.subr.mxu0 0.0
        %670 = vmatpush2.msra.mxu0 0.0
        %671 = vmatprep.subr.mxu0 0.0
        %672 = vmatpush2.msra.mxu0 0.0
        %673 = vmatprep.subr.mxu0 0.0
        %674 = vmatpush2.msra.mxu0 0.0
        %675 = vmatprep.subr.mxu0 0.0
        %676 = vmatpush2.msra.mxu0 0.0
        %677 = vmatprep.subr.mxu0 0.0
        %678 = vmatpush2.msra.mxu0 0.0
        %679 = vmatprep.subr.mxu0 0.0
        %680 = vmatpush2.msra.mxu0 0.0
        %681 = vmatprep.mubr.f32.mxu0 0.0
        %682 = vmatmul.mubr.f32.gmra.mxu0 %v615
        %v683 = vpop.f32.mrf.mxu0
        %v684 = vadd.f32 0.0, %v683
        %v685 = vpop.f32.mrf.mxu0
        %686 = vdwg.mxu0
        %v687 = vrcp.pop %v610
        %v688 = vmul.f32 %v684, %v687
        %v690 = vsel %vm362, %v688, 0
        %692 = vmatprep.subr.mxu0 0.0
        %693 = vmatpush1.msra.mxu0 0.0
        %694 = vmatprep.subr.mxu0 0.0
        %695 = vmatpush1.msra.mxu0 0.0
        %696 = vmatprep.subr.mxu0 0.0
        %697 = vmatpush1.msra.mxu0 0.0
        %698 = vmatprep.subr.mxu0 0.0
        %699 = vmatpush1.msra.mxu0 0.0
        %700 = vmatprep.subr.mxu0 0.0
        %701 = vmatpush1.msra.mxu0 0.0
        %702 = vmatprep.subr.mxu0 0.0
        %703 = vmatpush1.msra.mxu0 0.0
        %704 = vmatprep.subr.mxu0 0.0
        %705 = vmatpush1.msra.mxu0 0.0
        %706 = vmatprep.subr.mxu0 0.0
        %707 = vmatpush1.msra.mxu0 0.0
        %708 = vmatprep.subr.mxu0 0.0
        %709 = vmatpush1.msra.mxu0 0.0
        %710 = vmatprep.subr.mxu0 0.0
        %711 = vmatpush1.msra.mxu0 0.0
        %712 = vmatprep.subr.mxu0 0.0
        %713 = vmatpush1.msra.mxu0 0.0
        %714 = vmatprep.subr.mxu0 0.0
        %715 = vmatpush1.msra.mxu0 0.0
        %716 = vmatprep.subr.mxu0 0.0
        %717 = vmatpush1.msra.mxu0 0.0
        %718 = vmatprep.subr.mxu0 0.0
        %719 = vmatpush1.msra.mxu0 0.0
        %720 = vmatprep.subr.mxu0 0.0
        %721 = vmatpush1.msra.mxu0 0.0
        %722 = vmatprep.subr.mxu0 0.0
        %723 = vmatpush1.msra.mxu0 %v356
        %724 = vmatprep.subr.mxu0 0.0
        %725 = vmatpush2.msra.mxu0 0.0
        %726 = vmatprep.subr.mxu0 0.0
        %727 = vmatpush2.msra.mxu0 0.0
        %728 = vmatprep.subr.mxu0 0.0
        %729 = vmatpush2.msra.mxu0 0.0
        %730 = vmatprep.subr.mxu0 0.0
        %731 = vmatpush2.msra.mxu0 0.0
        %732 = vmatprep.subr.mxu0 0.0
        %733 = vmatpush2.msra.mxu0 0.0
        %734 = vmatprep.subr.mxu0 0.0
        %735 = vmatpush2.msra.mxu0 0.0
        %736 = vmatprep.subr.mxu0 0.0
        %737 = vmatpush2.msra.mxu0 0.0
        %738 = vmatprep.subr.mxu0 0.0
        %739 = vmatpush2.msra.mxu0 0.0
        %740 = vmatprep.subr.mxu0 0.0
        %741 = vmatpush2.msra.mxu0 0.0
        %742 = vmatprep.subr.mxu0 0.0
        %743 = vmatpush2.msra.mxu0 0.0
        %744 = vmatprep.subr.mxu0 0.0
        %745 = vmatpush2.msra.mxu0 0.0
        %746 = vmatprep.subr.mxu0 0.0
        %747 = vmatpush2.msra.mxu0 0.0
        %748 = vmatprep.subr.mxu0 0.0
        %749 = vmatpush2.msra.mxu0 0.0
        %750 = vmatprep.subr.mxu0 0.0
        %751 = vmatpush2.msra.mxu0 0.0
        %752 = vmatprep.subr.mxu0 0.0
        %753 = vmatpush2.msra.mxu0 0.0
        %754 = vmatprep.subr.mxu0 0.0
        %755 = vmatpush2.msra.mxu0 0.0
        %756 = vmatprep.mubr.f32.mxu0 0.0
        %757 = vmatmul.mubr.f32.gmra.mxu0 %v690
        %v758 = vpop.f32.mrf.mxu0
        %v759 = vadd.f32 0.0, %v758
        %v760 = vpop.f32.mrf.mxu0
        %761 = vdwg.mxu0
        %v763 = vsel %vm362, %v523, 0
        %765 = vmatprep.subr.mxu0 0.0
        %766 = vmatpush1.msra.mxu0 0.0
        %767 = vmatprep.subr.mxu0 0.0
        %768 = vmatpush1.msra.mxu0 0.0
        %769 = vmatprep.subr.mxu0 0.0
        %770 = vmatpush1.msra.mxu0 0.0
        %771 = vmatprep.subr.mxu0 0.0
        %772 = vmatpush1.msra.mxu0 0.0
        %773 = vmatprep.subr.mxu0 0.0
        %774 = vmatpush1.msra.mxu0 0.0
        %775 = vmatprep.subr.mxu0 0.0
        %776 = vmatpush1.msra.mxu0 0.0
        %777 = vmatprep.subr.mxu0 0.0
        %778 = vmatpush1.msra.mxu0 0.0
        %779 = vmatprep.subr.mxu0 0.0
        %780 = vmatpush1.msra.mxu0 0.0
        %781 = vmatprep.subr.mxu0 0.0
        %782 = vmatpush1.msra.mxu0 0.0
        %783 = vmatprep.subr.mxu0 0.0
        %784 = vmatpush1.msra.mxu0 0.0
        %785 = vmatprep.subr.mxu0 0.0
        %786 = vmatpush1.msra.mxu0 0.0
        %787 = vmatprep.subr.mxu0 0.0
        %788 = vmatpush1.msra.mxu0 0.0
        %789 = vmatprep.subr.mxu0 0.0
        %790 = vmatpush1.msra.mxu0 0.0
        %791 = vmatprep.subr.mxu0 0.0
        %792 = vmatpush1.msra.mxu0 0.0
        %793 = vmatprep.subr.mxu0 0.0
        %794 = vmatpush1.msra.mxu0 0.0
        %795 = vmatprep.subr.mxu0 0.0
        %796 = vmatpush1.msra.mxu0 %v355
        %797 = vmatprep.subr.mxu0 0.0
        %798 = vmatpush2.msra.mxu0 0.0
        %799 = vmatprep.subr.mxu0 0.0
        %800 = vmatpush2.msra.mxu0 0.0
        %801 = vmatprep.subr.mxu0 0.0
        %802 = vmatpush2.msra.mxu0 0.0
        %803 = vmatprep.subr.mxu0 0.0
        %804 = vmatpush2.msra.mxu0 0.0
        %805 = vmatprep.subr.mxu0 0.0
        %806 = vmatpush2.msra.mxu0 0.0
        %807 = vmatprep.subr.mxu0 0.0
        %808 = vmatpush2.msra.mxu0 0.0
        %809 = vmatprep.subr.mxu0 0.0
        %810 = vmatpush2.msra.mxu0 0.0
        %811 = vmatprep.subr.mxu0 0.0
        %812 = vmatpush2.msra.mxu0 0.0
        %813 = vmatprep.subr.mxu0 0.0
        %814 = vmatpush2.msra.mxu0 0.0
        %815 = vmatprep.subr.mxu0 0.0
        %816 = vmatpush2.msra.mxu0 0.0
        %817 = vmatprep.subr.mxu0 0.0
        %818 = vmatpush2.msra.mxu0 0.0
        %819 = vmatprep.subr.mxu0 0.0
        %820 = vmatpush2.msra.mxu0 0.0
        %821 = vmatprep.subr.mxu0 0.0
        %822 = vmatpush2.msra.mxu0 0.0
        %823 = vmatprep.subr.mxu0 0.0
        %824 = vmatpush2.msra.mxu0 0.0
        %825 = vmatprep.subr.mxu0 0.0
        %826 = vmatpush2.msra.mxu0 0.0
        %827 = vmatprep.subr.mxu0 0.0
        %828 = vmatpush2.msra.mxu0 0.0
        %829 = vmatprep.mubr.f32.mxu0 0.0
        %830 = vmatmul.mubr.f32.gmra.mxu0 %v763
        %v831 = vpop.f32.mrf.mxu0
        %v832 = vadd.f32 %v759, %v831
        %v833 = vpop.f32.mrf.mxu0
        %834 = vdwg.mxu0
        %835 = vrot.lane.b32.xlu0 %v352, 112
        %v836 = vpop.permute.xlu0 %835
        %837 = vrot.lane.b32.xlu0 %v352, 80
        %v838 = vpop.permute.xlu0 %837
        %v839 = vsel %vm362, %v836, 0
        %v841 = vsel %vm362, %v838, 0
        %843 = vmatprep.subr.mxu0 0.0
        %844 = vmatpush1.xpose.msra.mxu0 0.0
        %845 = vmatprep.subr.mxu0 0.0
        %846 = vmatpush1.xpose.msra.mxu0 0.0
        %847 = vmatprep.subr.mxu0 0.0
        %848 = vmatpush1.xpose.msra.mxu0 0.0
        %849 = vmatprep.subr.mxu0 0.0
        %850 = vmatpush1.xpose.msra.mxu0 0.0
        %851 = vmatprep.subr.mxu0 0.0
        %852 = vmatpush1.xpose.msra.mxu0 0.0
        %853 = vmatprep.subr.mxu0 0.0
        %854 = vmatpush1.xpose.msra.mxu0 0.0
        %855 = vmatprep.subr.mxu0 0.0
        %856 = vmatpush1.xpose.msra.mxu0 0.0
        %857 = vmatprep.subr.mxu0 0.0
        %858 = vmatpush1.xpose.msra.mxu0 0.0
        %859 = vmatprep.subr.mxu0 0.0
        %860 = vmatpush1.xpose.msra.mxu0 0.0
        %861 = vmatprep.subr.mxu0 0.0
        %862 = vmatpush1.xpose.msra.mxu0 0.0
        %863 = vmatprep.subr.mxu0 0.0
        %864 = vmatpush1.xpose.msra.mxu0 0.0
        %865 = vmatprep.subr.mxu0 0.0
        %866 = vmatpush1.xpose.msra.mxu0 0.0
        %867 = vmatprep.subr.mxu0 0.0
        %868 = vmatpush1.xpose.msra.mxu0 0.0
        %869 = vmatprep.subr.mxu0 0.0
        %870 = vmatpush1.xpose.msra.mxu0 0.0
        %871 = vmatprep.subr.mxu0 0.0
        %872 = vmatpush1.xpose.msra.mxu0 0.0
        %873 = vmatprep.subr.mxu0 0.0
        %874 = vmatpush1.xpose.msra.mxu0 %v841
        %875 = vmatprep.subr.mxu0 0.0
        %876 = vmatpush2.xpose.msra.mxu0 0.0
        %877 = vmatprep.subr.mxu0 0.0
        %878 = vmatpush2.xpose.msra.mxu0 0.0
        %879 = vmatprep.subr.mxu0 0.0
        %880 = vmatpush2.xpose.msra.mxu0 0.0
        %881 = vmatprep.subr.mxu0 0.0
        %882 = vmatpush2.xpose.msra.mxu0 0.0
        %883 = vmatprep.subr.mxu0 0.0
        %884 = vmatpush2.xpose.msra.mxu0 0.0
        %885 = vmatprep.subr.mxu0 0.0
        %886 = vmatpush2.xpose.msra.mxu0 0.0
        %887 = vmatprep.subr.mxu0 0.0
        %888 = vmatpush2.xpose.msra.mxu0 0.0
        %889 = vmatprep.subr.mxu0 0.0
        %890 = vmatpush2.xpose.msra.mxu0 0.0
        %891 = vmatprep.subr.mxu0 0.0
        %892 = vmatpush2.xpose.msra.mxu0 0.0
        %893 = vmatprep.subr.mxu0 0.0
        %894 = vmatpush2.xpose.msra.mxu0 0.0
        %895 = vmatprep.subr.mxu0 0.0
        %896 = vmatpush2.xpose.msra.mxu0 0.0
        %897 = vmatprep.subr.mxu0 0.0
        %898 = vmatpush2.xpose.msra.mxu0 0.0
        %899 = vmatprep.subr.mxu0 0.0
        %900 = vmatpush2.xpose.msra.mxu0 0.0
        %901 = vmatprep.subr.mxu0 0.0
        %902 = vmatpush2.xpose.msra.mxu0 0.0
        %903 = vmatprep.subr.mxu0 0.0
        %904 = vmatpush2.xpose.msra.mxu0 0.0
        %905 = vmatprep.subr.mxu0 0.0
        %906 = vmatpush2.xpose.msra.mxu0 0.0
        %907 = vmatprep.mubr.f32.mxu0 0.0
        %908 = vmatmul.mubr.f32.gmra.mxu0 %v839
        %v909 = vpop.f32.mrf.mxu0
        %v910 = vadd.f32 0.0, %v909
        %v911 = vpop.f32.mrf.mxu0
        %912 = vdwg.mxu0
        %v913 = vsel %vm362, %v910, -inf
        %914 = vmax.xlane.f32.xlu0 %v913
        %v915 = vpop.xlane.xlu0 %914
        %v916 = vsub.f32 %v910, %v915
        %v917 = vmul.f32 %v916, 1.442695
        %v918 = vpow.pop %v917
        %v919 = vsel %vm362, %v918, 0.0
        %920 = vadd.xlane.f32.xlu0 %v919
        %v921 = vpop.xlane.xlu0 %920
        %922 = vrot.lane.b32.xlu0 %v352, 48
        %v923 = vpop.permute.xlu0 %922
        %v926 = vsel %vm362, %v918, 0
        %928 = vmatprep.subr.mxu0 0.0
        %929 = vmatpush1.msra.mxu0 0.0
        %930 = vmatprep.subr.mxu0 0.0
        %931 = vmatpush1.msra.mxu0 0.0
        %932 = vmatprep.subr.mxu0 0.0
        %933 = vmatpush1.msra.mxu0 0.0
        %934 = vmatprep.subr.mxu0 0.0
        %935 = vmatpush1.msra.mxu0 0.0
        %936 = vmatprep.subr.mxu0 0.0
        %937 = vmatpush1.msra.mxu0 0.0
        %938 = vmatprep.subr.mxu0 0.0
        %939 = vmatpush1.msra.mxu0 0.0
        %940 = vmatprep.subr.mxu0 0.0
        %941 = vmatpush1.msra.mxu0 0.0
        %942 = vmatprep.subr.mxu0 0.0
        %943 = vmatpush1.msra.mxu0 0.0
        %944 = vmatprep.subr.mxu0 0.0
        %945 = vmatpush1.msra.mxu0 0.0
        %946 = vmatprep.subr.mxu0 0.0
        %947 = vmatpush1.msra.mxu0 0.0
        %948 = vmatprep.subr.mxu0 0.0
        %949 = vmatpush1.msra.mxu0 0.0
        %950 = vmatprep.subr.mxu0 0.0
        %951 = vmatpush1.msra.mxu0 0.0
        %952 = vmatprep.subr.mxu0 0.0
        %953 = vmatpush1.msra.mxu0 0.0
        %954 = vmatprep.subr.mxu0 0.0
        %955 = vmatpush1.msra.mxu0 0.0
        %956 = vmatprep.subr.mxu0 0.0
        %957 = vmatpush1.msra.mxu0 0.0
        %958 = vmatprep.subr.mxu0 0.0
        %959 = vmatpush1.msra.mxu0 %v923
        %960 = vmatprep.subr.mxu0 0.0
        %961 = vmatpush2.msra.mxu0 0.0
        %962 = vmatprep.subr.mxu0 0.0
        %963 = vmatpush2.msra.mxu0 0.0
        %964 = vmatprep.subr.mxu0 0.0
        %965 = vmatpush2.msra.mxu0 0.0
        %966 = vmatprep.subr.mxu0 0.0
        %967 = vmatpush2.msra.mxu0 0.0
        %968 = vmatprep.subr.mxu0 0.0
        %969 = vmatpush2.msra.mxu0 0.0
        %970 = vmatprep.subr.mxu0 0.0
        %971 = vmatpush2.msra.mxu0 0.0
        %972 = vmatprep.subr.mxu0 0.0
        %973 = vmatpush2.msra.mxu0 0.0
        %974 = vmatprep.subr.mxu0 0.0
        %975 = vmatpush2.msra.mxu0 0.0
        %976 = vmatprep.subr.mxu0 0.0
        %977 = vmatpush2.msra.mxu0 0.0
        %978 = vmatprep.subr.mxu0 0.0
        %979 = vmatpush2.msra.mxu0 0.0
        %980 = vmatprep.subr.mxu0 0.0
        %981 = vmatpush2.msra.mxu0 0.0
        %982 = vmatprep.subr.mxu0 0.0
        %983 = vmatpush2.msra.mxu0 0.0
        %984 = vmatprep.subr.mxu0 0.0
        %985 = vmatpush2.msra.mxu0 0.0
        %986 = vmatprep.subr.mxu0 0.0
        %987 = vmatpush2.msra.mxu0 0.0
        %988 = vmatprep.subr.mxu0 0.0
        %989 = vmatpush2.msra.mxu0 0.0
        %990 = vmatprep.subr.mxu0 0.0
        %991 = vmatpush2.msra.mxu0 0.0
        %992 = vmatprep.mubr.f32.mxu0 0.0
        %993 = vmatmul.mubr.f32.gmra.mxu0 %v926
        %v994 = vpop.f32.mrf.mxu0
        %v995 = vadd.f32 0.0, %v994
        %v996 = vpop.f32.mrf.mxu0
        %997 = vdwg.mxu0
        %v998 = vrcp.pop %v921
        %v999 = vmul.f32 %v995, %v998
        %v1001 = vsel %vm362, %v999, 0
        %1003 = vmatprep.subr.mxu0 0.0
        %1004 = vmatpush1.msra.mxu0 0.0
        %1005 = vmatprep.subr.mxu0 0.0
        %1006 = vmatpush1.msra.mxu0 0.0
        %1007 = vmatprep.subr.mxu0 0.0
        %1008 = vmatpush1.msra.mxu0 0.0
        %1009 = vmatprep.subr.mxu0 0.0
        %1010 = vmatpush1.msra.mxu0 0.0
        %1011 = vmatprep.subr.mxu0 0.0
        %1012 = vmatpush1.msra.mxu0 0.0
        %1013 = vmatprep.subr.mxu0 0.0
        %1014 = vmatpush1.msra.mxu0 0.0
        %1015 = vmatprep.subr.mxu0 0.0
        %1016 = vmatpush1.msra.mxu0 0.0
        %1017 = vmatprep.subr.mxu0 0.0
        %1018 = vmatpush1.msra.mxu0 0.0
        %1019 = vmatprep.subr.mxu0 0.0
        %1020 = vmatpush1.msra.mxu0 0.0
        %1021 = vmatprep.subr.mxu0 0.0
        %1022 = vmatpush1.msra.mxu0 0.0
        %1023 = vmatprep.subr.mxu0 0.0
        %1024 = vmatpush1.msra.mxu0 0.0
        %1025 = vmatprep.subr.mxu0 0.0
        %1026 = vmatpush1.msra.mxu0 0.0
        %1027 = vmatprep.subr.mxu0 0.0
        %1028 = vmatpush1.msra.mxu0 0.0
        %1029 = vmatprep.subr.mxu0 0.0
        %1030 = vmatpush1.msra.mxu0 0.0
        %1031 = vmatprep.subr.mxu0 0.0
        %1032 = vmatpush1.msra.mxu0 0.0
        %1033 = vmatprep.subr.mxu0 0.0
        %1034 = vmatpush1.msra.mxu0 %v357
        %1035 = vmatprep.subr.mxu0 0.0
        %1036 = vmatpush2.msra.mxu0 0.0
        %1037 = vmatprep.subr.mxu0 0.0
        %1038 = vmatpush2.msra.mxu0 0.0
        %1039 = vmatprep.subr.mxu0 0.0
        %1040 = vmatpush2.msra.mxu0 0.0
        %1041 = vmatprep.subr.mxu0 0.0
        %1042 = vmatpush2.msra.mxu0 0.0
        %1043 = vmatprep.subr.mxu0 0.0
        %1044 = vmatpush2.msra.mxu0 0.0
        %1045 = vmatprep.subr.mxu0 0.0
        %1046 = vmatpush2.msra.mxu0 0.0
        %1047 = vmatprep.subr.mxu0 0.0
        %1048 = vmatpush2.msra.mxu0 0.0
        %1049 = vmatprep.subr.mxu0 0.0
        %1050 = vmatpush2.msra.mxu0 0.0
        %1051 = vmatprep.subr.mxu0 0.0
        %1052 = vmatpush2.msra.mxu0 0.0
        %1053 = vmatprep.subr.mxu0 0.0
        %1054 = vmatpush2.msra.mxu0 0.0
        %1055 = vmatprep.subr.mxu0 0.0
        %1056 = vmatpush2.msra.mxu0 0.0
        %1057 = vmatprep.subr.mxu0 0.0
        %1058 = vmatpush2.msra.mxu0 0.0
        %1059 = vmatprep.subr.mxu0 0.0
        %1060 = vmatpush2.msra.mxu0 0.0
        %1061 = vmatprep.subr.mxu0 0.0
        %1062 = vmatpush2.msra.mxu0 0.0
        %1063 = vmatprep.subr.mxu0 0.0
        %1064 = vmatpush2.msra.mxu0 0.0
        %1065 = vmatprep.subr.mxu0 0.0
        %1066 = vmatpush2.msra.mxu0 0.0
        %1067 = vmatprep.mubr.f32.mxu0 0.0
        %1068 = vmatmul.mubr.f32.gmra.mxu0 %v1001
        %v1069 = vpop.f32.mrf.mxu0
        %v1070 = vadd.f32 0.0, %v1069
        %v1071 = vpop.f32.mrf.mxu0
        %1072 = vdwg.mxu0
        %v1073 = vadd.f32 %v832, %v1070
        %1074 = vrot.lane.b32.xlu0 %v352, 104
        %v1075 = vpop.permute.xlu0 %1074
        %1076 = vrot.lane.b32.xlu0 %v352, 72
        %v1077 = vpop.permute.xlu0 %1076
        %v1078 = vsel %vm362, %v1075, 0
        %v1080 = vsel %vm362, %v1077, 0
        %1082 = vmatprep.subr.mxu0 0.0
        %1083 = vmatpush1.xpose.msra.mxu0 0.0
        %1084 = vmatprep.subr.mxu0 0.0
        %1085 = vmatpush1.xpose.msra.mxu0 0.0
        %1086 = vmatprep.subr.mxu0 0.0
        %1087 = vmatpush1.xpose.msra.mxu0 0.0
        %1088 = vmatprep.subr.mxu0 0.0
        %1089 = vmatpush1.xpose.msra.mxu0 0.0
        %1090 = vmatprep.subr.mxu0 0.0
        %1091 = vmatpush1.xpose.msra.mxu0 0.0
        %1092 = vmatprep.subr.mxu0 0.0
        %1093 = vmatpush1.xpose.msra.mxu0 0.0
        %1094 = vmatprep.subr.mxu0 0.0
        %1095 = vmatpush1.xpose.msra.mxu0 0.0
        %1096 = vmatprep.subr.mxu0 0.0
        %1097 = vmatpush1.xpose.msra.mxu0 0.0
        %1098 = vmatprep.subr.mxu0 0.0
        %1099 = vmatpush1.xpose.msra.mxu0 0.0
        %1100 = vmatprep.subr.mxu0 0.0
        %1101 = vmatpush1.xpose.msra.mxu0 0.0
        %1102 = vmatprep.subr.mxu0 0.0
        %1103 = vmatpush1.xpose.msra.mxu0 0.0
        %1104 = vmatprep.subr.mxu0 0.0
        %1105 = vmatpush1.xpose.msra.mxu0 0.0
        %1106 = vmatprep.subr.mxu0 0.0
        %1107 = vmatpush1.xpose.msra.mxu0 0.0
        %1108 = vmatprep.subr.mxu0 0.0
        %1109 = vmatpush1.xpose.msra.mxu0 0.0
        %1110 = vmatprep.subr.mxu0 0.0
        %1111 = vmatpush1.xpose.msra.mxu0 0.0
        %1112 = vmatprep.subr.mxu0 0.0
        %1113 = vmatpush1.xpose.msra.mxu0 %v1080
        %1114 = vmatprep.subr.mxu0 0.0
        %1115 = vmatpush2.xpose.msra.mxu0 0.0
        %1116 = vmatprep.subr.mxu0 0.0
        %1117 = vmatpush2.xpose.msra.mxu0 0.0
        %1118 = vmatprep.subr.mxu0 0.0
        %1119 = vmatpush2.xpose.msra.mxu0 0.0
        %1120 = vmatprep.subr.mxu0 0.0
        %1121 = vmatpush2.xpose.msra.mxu0 0.0
        %1122 = vmatprep.subr.mxu0 0.0
        %1123 = vmatpush2.xpose.msra.mxu0 0.0
        %1124 = vmatprep.subr.mxu0 0.0
        %1125 = vmatpush2.xpose.msra.mxu0 0.0
        %1126 = vmatprep.subr.mxu0 0.0
        %1127 = vmatpush2.xpose.msra.mxu0 0.0
        %1128 = vmatprep.subr.mxu0 0.0
        %1129 = vmatpush2.xpose.msra.mxu0 0.0
        %1130 = vmatprep.subr.mxu0 0.0
        %1131 = vmatpush2.xpose.msra.mxu0 0.0
        %1132 = vmatprep.subr.mxu0 0.0
        %1133 = vmatpush2.xpose.msra.mxu0 0.0
        %1134 = vmatprep.subr.mxu0 0.0
        %1135 = vmatpush2.xpose.msra.mxu0 0.0
        %1136 = vmatprep.subr.mxu0 0.0
        %1137 = vmatpush2.xpose.msra.mxu0 0.0
        %1138 = vmatprep.subr.mxu0 0.0
        %1139 = vmatpush2.xpose.msra.mxu0 0.0
        %1140 = vmatprep.subr.mxu0 0.0
        %1141 = vmatpush2.xpose.msra.mxu0 0.0
        %1142 = vmatprep.subr.mxu0 0.0
        %1143 = vmatpush2.xpose.msra.mxu0 0.0
        %1144 = vmatprep.subr.mxu0 0.0
        %1145 = vmatpush2.xpose.msra.mxu0 0.0
        %1146 = vmatprep.mubr.f32.mxu0 0.0
        %1147 = vmatmul.mubr.f32.gmra.mxu0 %v1078
        %v1148 = vpop.f32.mrf.mxu0
        %v1149 = vadd.f32 0.0, %v1148
        %v1150 = vpop.f32.mrf.mxu0
        %1151 = vdwg.mxu0
        %v1152 = vsel %vm362, %v1149, -inf
        %1153 = vmax.xlane.f32.xlu0 %v1152
        %v1154 = vpop.xlane.xlu0 %1153
        %v1155 = vsub.f32 %v1149, %v1154
        %v1156 = vmul.f32 %v1155, 1.442695
        %v1157 = vpow.pop %v1156
        %v1158 = vsel %vm362, %v1157, 0.0
        %1159 = vadd.xlane.f32.xlu0 %v1158
        %v1160 = vpop.xlane.xlu0 %1159
        %1161 = vrot.lane.b32.xlu0 %v352, 40
        %v1162 = vpop.permute.xlu0 %1161
        %v1165 = vsel %vm362, %v1157, 0
        %1167 = vmatprep.subr.mxu0 0.0
        %1168 = vmatpush1.msra.mxu0 0.0
        %1169 = vmatprep.subr.mxu0 0.0
        %1170 = vmatpush1.msra.mxu0 0.0
        %1171 = vmatprep.subr.mxu0 0.0
        %1172 = vmatpush1.msra.mxu0 0.0
        %1173 = vmatprep.subr.mxu0 0.0
        %1174 = vmatpush1.msra.mxu0 0.0
        %1175 = vmatprep.subr.mxu0 0.0
        %1176 = vmatpush1.msra.mxu0 0.0
        %1177 = vmatprep.subr.mxu0 0.0
        %1178 = vmatpush1.msra.mxu0 0.0
        %1179 = vmatprep.subr.mxu0 0.0
        %1180 = vmatpush1.msra.mxu0 0.0
        %1181 = vmatprep.subr.mxu0 0.0
        %1182 = vmatpush1.msra.mxu0 0.0
        %1183 = vmatprep.subr.mxu0 0.0
        %1184 = vmatpush1.msra.mxu0 0.0
        %1185 = vmatprep.subr.mxu0 0.0
        %1186 = vmatpush1.msra.mxu0 0.0
        %1187 = vmatprep.subr.mxu0 0.0
        %1188 = vmatpush1.msra.mxu0 0.0
        %1189 = vmatprep.subr.mxu0 0.0
        %1190 = vmatpush1.msra.mxu0 0.0
        %1191 = vmatprep.subr.mxu0 0.0
        %1192 = vmatpush1.msra.mxu0 0.0
        %1193 = vmatprep.subr.mxu0 0.0
        %1194 = vmatpush1.msra.mxu0 0.0
        %1195 = vmatprep.subr.mxu0 0.0
        %1196 = vmatpush1.msra.mxu0 0.0
        %1197 = vmatprep.subr.mxu0 0.0
        %1198 = vmatpush1.msra.mxu0 %v1162
        %1199 = vmatprep.subr.mxu0 0.0
        %1200 = vmatpush2.msra.mxu0 0.0
        %1201 = vmatprep.subr.mxu0 0.0
        %1202 = vmatpush2.msra.mxu0 0.0
        %1203 = vmatprep.subr.mxu0 0.0
        %1204 = vmatpush2.msra.mxu0 0.0
        %1205 = vmatprep.subr.mxu0 0.0
        %1206 = vmatpush2.msra.mxu0 0.0
        %1207 = vmatprep.subr.mxu0 0.0
        %1208 = vmatpush2.msra.mxu0 0.0
        %1209 = vmatprep.subr.mxu0 0.0
        %1210 = vmatpush2.msra.mxu0 0.0
        %1211 = vmatprep.subr.mxu0 0.0
        %1212 = vmatpush2.msra.mxu0 0.0
        %1213 = vmatprep.subr.mxu0 0.0
        %1214 = vmatpush2.msra.mxu0 0.0
        %1215 = vmatprep.subr.mxu0 0.0
        %1216 = vmatpush2.msra.mxu0 0.0
        %1217 = vmatprep.subr.mxu0 0.0
        %1218 = vmatpush2.msra.mxu0 0.0
        %1219 = vmatprep.subr.mxu0 0.0
        %1220 = vmatpush2.msra.mxu0 0.0
        %1221 = vmatprep.subr.mxu0 0.0
        %1222 = vmatpush2.msra.mxu0 0.0
        %1223 = vmatprep.subr.mxu0 0.0
        %1224 = vmatpush2.msra.mxu0 0.0
        %1225 = vmatprep.subr.mxu0 0.0
        %1226 = vmatpush2.msra.mxu0 0.0
        %1227 = vmatprep.subr.mxu0 0.0
        %1228 = vmatpush2.msra.mxu0 0.0
        %1229 = vmatprep.subr.mxu0 0.0
        %1230 = vmatpush2.msra.mxu0 0.0
        %1231 = vmatprep.mubr.f32.mxu0 0.0
        %1232 = vmatmul.mubr.f32.gmra.mxu0 %v1165
        %v1233 = vpop.f32.mrf.mxu0
        %v1234 = vadd.f32 0.0, %v1233
        %v1235 = vpop.f32.mrf.mxu0
        %1236 = vdwg.mxu0
        %v1237 = vrcp.pop %v1160
        %v1238 = vmul.f32 %v1234, %v1237
        %v1240 = vsel %vm362, %v1238, 0
        %1242 = vmatprep.subr.mxu0 0.0
        %1243 = vmatpush1.msra.mxu0 0.0
        %1244 = vmatprep.subr.mxu0 0.0
        %1245 = vmatpush1.msra.mxu0 0.0
        %1246 = vmatprep.subr.mxu0 0.0
        %1247 = vmatpush1.msra.mxu0 0.0
        %1248 = vmatprep.subr.mxu0 0.0
        %1249 = vmatpush1.msra.mxu0 0.0
        %1250 = vmatprep.subr.mxu0 0.0
        %1251 = vmatpush1.msra.mxu0 0.0
        %1252 = vmatprep.subr.mxu0 0.0
        %1253 = vmatpush1.msra.mxu0 0.0
        %1254 = vmatprep.subr.mxu0 0.0
        %1255 = vmatpush1.msra.mxu0 0.0
        %1256 = vmatprep.subr.mxu0 0.0
        %1257 = vmatpush1.msra.mxu0 0.0
        %1258 = vmatprep.subr.mxu0 0.0
        %1259 = vmatpush1.msra.mxu0 0.0
        %1260 = vmatprep.subr.mxu0 0.0
        %1261 = vmatpush1.msra.mxu0 0.0
        %1262 = vmatprep.subr.mxu0 0.0
        %1263 = vmatpush1.msra.mxu0 0.0
        %1264 = vmatprep.subr.mxu0 0.0
        %1265 = vmatpush1.msra.mxu0 0.0
        %1266 = vmatprep.subr.mxu0 0.0
        %1267 = vmatpush1.msra.mxu0 0.0
        %1268 = vmatprep.subr.mxu0 0.0
        %1269 = vmatpush1.msra.mxu0 0.0
        %1270 = vmatprep.subr.mxu0 0.0
        %1271 = vmatpush1.msra.mxu0 0.0
        %1272 = vmatprep.subr.mxu0 0.0
        %1273 = vmatpush1.msra.mxu0 %v358
        %1274 = vmatprep.subr.mxu0 0.0
        %1275 = vmatpush2.msra.mxu0 0.0
        %1276 = vmatprep.subr.mxu0 0.0
        %1277 = vmatpush2.msra.mxu0 0.0
        %1278 = vmatprep.subr.mxu0 0.0
        %1279 = vmatpush2.msra.mxu0 0.0
        %1280 = vmatprep.subr.mxu0 0.0
        %1281 = vmatpush2.msra.mxu0 0.0
        %1282 = vmatprep.subr.mxu0 0.0
        %1283 = vmatpush2.msra.mxu0 0.0
        %1284 = vmatprep.subr.mxu0 0.0
        %1285 = vmatpush2.msra.mxu0 0.0
        %1286 = vmatprep.subr.mxu0 0.0
        %1287 = vmatpush2.msra.mxu0 0.0
        %1288 = vmatprep.subr.mxu0 0.0
        %1289 = vmatpush2.msra.mxu0 0.0
        %1290 = vmatprep.subr.mxu0 0.0
        %1291 = vmatpush2.msra.mxu0 0.0
        %1292 = vmatprep.subr.mxu0 0.0
        %1293 = vmatpush2.msra.mxu0 0.0
        %1294 = vmatprep.subr.mxu0 0.0
        %1295 = vmatpush2.msra.mxu0 0.0
        %1296 = vmatprep.subr.mxu0 0.0
        %1297 = vmatpush2.msra.mxu0 0.0
        %1298 = vmatprep.subr.mxu0 0.0
        %1299 = vmatpush2.msra.mxu0 0.0
        %1300 = vmatprep.subr.mxu0 0.0
        %1301 = vmatpush2.msra.mxu0 0.0
        %1302 = vmatprep.subr.mxu0 0.0
        %1303 = vmatpush2.msra.mxu0 0.0
        %1304 = vmatprep.subr.mxu0 0.0
        %1305 = vmatpush2.msra.mxu0 0.0
        %1306 = vmatprep.mubr.f32.mxu0 0.0
        %1307 = vmatmul.mubr.f32.gmra.mxu0 %v1240
        %v1308 = vpop.f32.mrf.mxu0
        %v1309 = vadd.f32 0.0, %v1308
        %v1310 = vpop.f32.mrf.mxu0
        %1311 = vdwg.mxu0
        %v1312 = vadd.f32 %v1073, %v1309
        %v1313 = vld [vmem:[%s4] sm:$0x1]
        %v1315 = vlaneseq
        %v1316 = vshrl.u32 %v1315, 7
        %v1317 = vsub.s32 0, %v1316
        %v1318 = vrot.slane %v1313, %v1317
        %v1320 = vadd.f32 %v1312, %v1318
        %1321 = vst.msk [vmem:[%s268] sm:$0xff] %vm281, %v1320
        %s1322 = sand.u32 %s141, 1
        %s1323 = scalar_lea.sflag [#allocation4], %s1322
        %s1324 = sand.u32 %s141, 1
        %s1325 = smul.addr %s1324, 8
        %s1326 = scalar_lea.vmem [#allocation8], %s1325
        // Predicated region
        $region53: #{tpu_custom_call.1} parent=39 // pred_check
          %p1327 = pneg %p151
        $region54: #{tpu_custom_call.1} parent=39 // pred_check_branch
          %1329 = sbr.rel (%p1327) target = $region56
        $region55: #{tpu_custom_call.1} parent=39 // pred_region
          %s1331 = ssub.s32 128, 128
          %1332 = vsyncadd %s1323, %s1331
          %s1333 = smul.addr %s23, 128
          %s1334 = scalar_lea.hbm %s5, %s1333
          %s1336 = sshll.u32 %s1326, 4
          %s1337 = int_to_ptr.vmem [resolvable:$true] %s1336
          %1339 = dma.vmem_to_hbm [thread:$0]  %s1337, 128, %s1334, %s1323
        $region56: #{tpu_custom_call.1} parent=39 // pred_fallthru
          _
      $region40: #{tpu_custom_call.1} parent=5 // pred_fallthru
        _
      %p1340 = scmp.le.s32.totalorder 2, %s18
      // Predicated region
      $region57: #{tpu_custom_call.1} parent=5 // pred_check
        %p1341 = pneg %p1340
      $region58: #{tpu_custom_call.1} parent=5 // pred_check_branch
        %1343 = sbr.rel (%p1341) target = $region60
      $region59: #{tpu_custom_call.1} parent=5 // pred_region
        %s1344 = ssub.s32 %s18, 2
        // Predicated region
        $region61: #{tpu_custom_call.1} parent=59 // pred_check
          %p1345 = pneg %p157
        $region62: #{tpu_custom_call.1} parent=59 // pred_check_branch
          %1347 = sbr.rel (%p1345) target = $region64
        $region63: #{tpu_custom_call.1} parent=59 // pred_region
          %s1348 = sand.u32 %s142, 1
          %s1349 = scalar_lea.sflag [#allocation4], %s1348
          %s1350 = sand.u32 %s142, 1
          %s1351 = smul.addr %s1350, 8
          %s1352 = scalar_lea.vmem [#allocation8], %s1351
          %1353 = dma.done %s1349, 128
        $region64: #{tpu_custom_call.1} parent=59 // pred_fallthru
          _
      $region60: #{tpu_custom_call.1} parent=5 // pred_fallthru
        _
    $region6: #{tpu_custom_call.1} parent=1 // loop_footer
      %s22 = sadd.s32 1, %s18
    $region7: #{tpu_custom_call.1} parent=1 // loop_footer_branch
      %17 = sbr.rel target = $region3
    $region8: #{tpu_custom_call.1} parent=1 // loop_exit
      _
    %1354 = vsyncpa [#allocation3], 1
    %s1355 = scalar_lea.sflag [#allocation3], 1
    %1356 = vsyncpa %s1355, 1
    %1357 = vsyncpa [#allocation6], 1
    %1358 = vsyncpa [#allocation4], 1
    %s1359 = scalar_lea.sflag [#allocation4], 1
    %1360 = vsyncpa %s1359, 1

</llo_original>
